<compile_context>
chip_gen: v6e
topology: v6e:2x2x1
jax: 0.10.0
libtpu: 0.0.40
codegen_flags: <defaults>
</compile_context>

<pallas_src>
import functools

import jax
import jax.numpy as jnp
from jax.experimental import pallas as pl
from jax.experimental.pallas import tpu as pltpu

MULTS = [5, 9, 7, 2, 2, 1, 2]  # dorsal, ventral, visualrois, faces, words, places, bodies
N_LARGE = len(MULTS)


def _round_up(x, m):
    return (x + m - 1) // m * m


def _fmri_kernel(x_ref, wl_ref, ws_ref, bias_ref, g_ref, beta_ref, o_ref, *,
                 eps, e_model, k_offs, k_pads, small_off, n_small, enc_in):
    # x_ref    : (BB, D_total)        bf16  packed activations (large tokens at
    #                                       8-aligned offsets, then R*enc_in small)
    # wl_ref   : (K_large_pad, E)     bf16  large-token weights packed along K
    # ws_ref   : (R*enc_in, R*E)      bf16  block-diagonal small-token weights
    # bias_ref : (1, T*E)             f32   all biases, lane-concatenated per token
    # g_ref / beta_ref : (1, E)       f32   LayerNorm affine
    # o_ref    : (BB, T*E)            bf16  output, lane-concatenated per token
    gamma = g_ref[...]        # hoisted once (broadcasts are not CSE'd)
    beta = beta_ref[...]
    inv_e = 1.0 / e_model
    n_large = len(k_offs)

    def ln(y):
        # Centered two-pass LayerNorm on a (BB, E) f32 block (cancellation-safe).
        mean = jnp.sum(y, axis=-1, keepdims=True) * inv_e
        d = y - mean
        var = jnp.sum(d * d, axis=-1, keepdims=True) * inv_e
        return d * jax.lax.rsqrt(var + eps) * gamma + beta

    # --- 7 heterogeneous large-ROI tokens, each at its true (8-rounded) K ----
    for t in range(n_large):
        lo, kw = k_offs[t], k_pads[t]
        y = jnp.dot(x_ref[:, lo:lo + kw], wl_ref[lo:lo + kw, :],
                    preferred_element_type=jnp.float32)
        y = y + bias_ref[:, t * e_model:(t + 1) * e_model]
        # 128-aligned lane slice of the output -> dense, unmasked store.
        o_ref[:, t * e_model:(t + 1) * e_model] = ln(y).astype(o_ref.dtype)

    # --- brain_roi small tokens: ONE block-diagonal matmul (K = R*enc_in) ----
    xs = x_ref[:, small_off:small_off + n_small * enc_in]
    ys = jnp.dot(xs, ws_ref[...], preferred_element_type=jnp.float32)  # (BB, R*E)
    ys = ys + bias_ref[:, n_large * e_model:(n_large + n_small) * e_model]
    for r in range(n_small):
        t = n_large + r
        o_ref[:, t * e_model:(t + 1) * e_model] = (
            ln(ys[:, r * e_model:(r + 1) * e_model]).astype(o_ref.dtype))


def fmri_embedding_pallas(x_packed, w_large, w_small_bd, bias_all, gamma, beta, *,
                          k_offs, k_pads, n_small, enc_in, e_model, eps=1e-5,
                          batch_block=256):
    B, d_total = x_packed.shape
    k_large_pad = w_large.shape[0]
    T = len(k_offs) + n_small
    TE = T * e_model
    assert bias_all.shape == (1, TE)

    # Batch-block choice: default 256 (full MXU M on v6e/v7x), clamped to the
    # batch, and kept such that the grid has >= 2 steps when possible so both
    # v7x TensorCores are used ("parallel" grid axis).
    b8 = _round_up(B, 8)
    bb = max(8, min(_round_up(batch_block, 8), b8))
    if b8 // bb < 2 and b8 > 8:
        bb = _round_up(b8 // 2, 8)
    bp = _round_up(B, bb)
    if bp != B:
        x_packed = jnp.pad(x_packed, ((0, bp - B), (0, 0)))
    grid = (bp // bb,)

    kernel = functools.partial(
        _fmri_kernel, eps=eps, e_model=e_model, k_offs=tuple(k_offs),
        k_pads=tuple(k_pads), small_off=k_large_pad, n_small=n_small,
        enc_in=enc_in)

    out = pl.pallas_call(
        kernel,
        out_shape=jax.ShapeDtypeStruct((bp, TE), jnp.bfloat16),
        grid=grid,
        in_specs=[
            # batch-blocked packed activations
            pl.BlockSpec((bb, d_total), lambda i: (i, 0)),
            # parameters: constant index map -> fetched once, resident
            pl.BlockSpec((k_large_pad, e_model), lambda i: (0, 0)),
            pl.BlockSpec(w_small_bd.shape, lambda i: (0, 0)),
            pl.BlockSpec((1, TE), lambda i: (0, 0)),
            pl.BlockSpec((1, e_model), lambda i: (0, 0)),
            pl.BlockSpec((1, e_model), lambda i: (0, 0)),
        ],
        out_specs=pl.BlockSpec((bb, TE), lambda i: (i, 0)),
        compiler_params=pltpu.CompilerParams(
            dimension_semantics=("parallel",),
            vmem_limit_bytes=32 * 1024 * 1024,  # safe on v5e/v6e/v7x
        ),
    )(x_packed, w_large, w_small_bd, bias_all, gamma, beta)

    # (bp, T*E) is row-major-contiguous with (bp, T, E): free metadata reshape.
    return out[:B].reshape(B, T, e_model)


def make_params(key, brain_roi, enc_in, e_model):
    """Parameter init mirroring the module's __init__, plus kernel-side packing."""
    large_dims = [m * enc_in for m in MULTS]
    k_pads = [_round_up(d, 8) for d in large_dims]     # per-token K, 8-aligned
    k_offs = [0]
    for p in k_pads[:-1]:
        k_offs.append(k_offs[-1] + p)
    k_large_pad = sum(k_pads)
    T = N_LARGE + brain_roi

    keys = jax.random.split(key, 2 * T)
    wl_raw, bl_raw, ws_raw, bs_raw = [], [], [], []
    for t, d in enumerate(large_dims):
        w = jax.random.normal(keys[2 * t], (d, e_model), jnp.float32) * 0.05
        wl_raw.append(w.astype(jnp.bfloat16))
        bl_raw.append(jax.random.normal(keys[2 * t + 1], (e_model,), jnp.float32) * 0.05)
    for r in range(brain_roi):
        k0 = keys[2 * (N_LARGE + r)]
        k1 = keys[2 * (N_LARGE + r) + 1]
        w = jax.random.normal(k0, (enc_in, e_model), jnp.float32) * 0.05
        ws_raw.append(w.astype(jnp.bfloat16))
        bs_raw.append(jax.random.normal(k1, (e_model,), jnp.float32) * 0.05)

    # Large-token weights packed along K at 8-aligned offsets (pad rows are zero).
    w_large = jnp.zeros((k_large_pad, e_model), jnp.bfloat16)
    for t, d in enumerate(large_dims):
        w_large = w_large.at[k_offs[t]:k_offs[t] + d, :].set(wl_raw[t])
    # Small-token weights merged into one block-diagonal matrix (built once).
    w_small_bd = jnp.zeros((brain_roi * enc_in, brain_roi * e_model), jnp.bfloat16)
    for r in range(brain_roi):
        w_small_bd = w_small_bd.at[r * enc_in:(r + 1) * enc_in,
                                   r * e_model:(r + 1) * e_model].set(ws_raw[r])
    bias_all = jnp.concatenate(bl_raw + bs_raw).reshape(1, T * e_model)
    gamma = jnp.ones((1, e_model), jnp.float32)
    beta = jnp.zeros((1, e_model), jnp.float32)

    packed = dict(w_large=w_large, w_small_bd=w_small_bd, bias_all=bias_all,
                  gamma=gamma, beta=beta, k_offs=k_offs, k_pads=k_pads,
                  large_dims=large_dims)
    raw = dict(wl=wl_raw, bl=bl_raw, ws=ws_raw, bs=bs_raw)
    return packed, raw


def pack_inputs(srcs, src, large_dims, k_offs, k_pads):
    """Pack all 7 ROI-group inputs + per-ROI rows into one lane-dense array."""
    B = srcs[0].shape[0]
    k_large_pad = sum(k_pads)
    brain_roi, enc_in = src.shape[1], src.shape[2]
    d_total = k_large_pad + brain_roi * enc_in
    x = jnp.zeros((B, d_total), jnp.float32)
    for t, s in enumerate(srcs):
        x = x.at[:, k_offs[t]:k_offs[t] + large_dims[t]].set(s)
    x = x.at[:, k_large_pad:].set(src.reshape(B, brain_roi * enc_in))
    return x.astype(jnp.bfloat16)


def reference_forward(srcs, src, raw, gamma, beta, eps=1e-5):
    """Pure-JAX reference matching the PyTorch forward (eval mode)."""
    f32 = jnp.float32
    ys = []
    for t in range(N_LARGE):
        x = srcs[t].astype(jnp.bfloat16).astype(f32)
        ys.append(x @ raw["wl"][t].astype(f32) + raw["bl"][t])
    for r in range(src.shape[1]):
        x = src[:, r, :].astype(jnp.bfloat16).astype(f32)
        ys.append(x @ raw["ws"][r].astype(f32) + raw["bs"][r])
    y = jnp.stack(ys, axis=1)                        # (B, T, E)
    mean = jnp.mean(y, axis=-1, keepdims=True)
    var = jnp.mean((y - mean) ** 2, axis=-1, keepdims=True)
    return (y - mean) / jnp.sqrt(var + eps) * gamma[0] + beta[0]


if __name__ == "__main__":
    # Small, forward-consistent shapes; e_model=128 keeps every per-token store
    # lane-tile aligned (dense), B=16 gives a 2-step parallel batch grid.
    B, enc_in, e_model, brain_roi = 16, 4, 128, 8
    # TODO(synk): training-mode dropout (random masking) intentionally omitted
    # (dropout is identity in eval mode).

    key = jax.random.PRNGKey(0)
    key_p, key_x = jax.random.split(key)
    params, raw = make_params(key_p, brain_roi, enc_in, e_model)

    xkeys = jax.random.split(key_x, N_LARGE + 1)
    srcs = [jax.random.normal(xkeys[i], (B, MULTS[i] * enc_in), jnp.float32)
            for i in range(N_LARGE)]
    src = jax.random.normal(xkeys[N_LARGE], (B, brain_roi, enc_in), jnp.float32)

    x_packed = pack_inputs(srcs, src, params["large_dims"],
                           params["k_offs"], params["k_pads"])

    out = fmri_embedding_pallas(
        x_packed, params["w_large"], params["w_small_bd"], params["bias_all"],
        params["gamma"], params["beta"],
        k_offs=params["k_offs"], k_pads=params["k_pads"],
        n_small=brain_roi, enc_in=enc_in, e_model=e_model)
    out = jax.block_until_ready(out)                 # (B, 7 + brain_roi, e_model)

    ref = reference_forward(srcs, src, raw, params["gamma"], params["beta"])
    assert out.shape == (B, N_LARGE + brain_roi, e_model)
    assert bool(jnp.allclose(out.astype(jnp.float32), ref, atol=3e-2, rtol=3e-2))

    print("KERNEL_OK")
</pallas_src>

<mosaic_0001>
module attributes {stable_mosaic.version = 11 : i64} {
  func.func @_fmri_kernel(%arg0: i32, %arg1: memref<8x160xbf16, #tpu.memory_space<vmem>>, %arg2: memref<128x128xbf16, #tpu.memory_space<vmem>>, %arg3: memref<32x1024xbf16, #tpu.memory_space<vmem>>, %arg4: memref<1x1920xf32, #tpu.memory_space<vmem>>, %arg5: memref<1x128xf32, #tpu.memory_space<vmem>>, %arg6: memref<1x128xf32, #tpu.memory_space<vmem>>, %arg7: memref<8x1920xbf16, #tpu.memory_space<vmem>>) attributes {dimension_semantics = [#tpu.dimension_semantics<parallel>], iteration_bounds = array<i64: 2>, scalar_prefetch = 0 : i64, scratch_operands = 0 : i64, tpu.core_type = #tpu.core_type<tc>, window_params = [{transform_indices = @transform_0, window_bounds = array<i64: 8, 160>}, {pipeline_mode = #tpu.pipeline_mode<synchronous>, transform_indices = @transform_1, window_bounds = array<i64: 128, 128>}, {pipeline_mode = #tpu.pipeline_mode<synchronous>, transform_indices = @transform_2, window_bounds = array<i64: 32, 1024>}, {pipeline_mode = #tpu.pipeline_mode<synchronous>, transform_indices = @transform_3, window_bounds = array<i64: 1, 1920>}, {pipeline_mode = #tpu.pipeline_mode<synchronous>, transform_indices = @transform_4, window_bounds = array<i64: 1, 128>}, {pipeline_mode = #tpu.pipeline_mode<synchronous>, transform_indices = @transform_5, window_bounds = array<i64: 1, 128>}, {transform_indices = @transform_6, window_bounds = array<i64: 8, 1920>}]} {
    %c0 = arith.constant 0 : index
    %c0_0 = arith.constant 0 : index
    %0 = vector.load %arg5[%c0, %c0_0] : memref<1x128xf32, #tpu.memory_space<vmem>>, vector<1x128xf32>
    %c0_1 = arith.constant 0 : index
    %c0_2 = arith.constant 0 : index
    %1 = vector.load %arg6[%c0_1, %c0_2] : memref<1x128xf32, #tpu.memory_space<vmem>>, vector<1x128xf32>
    %c0_3 = arith.constant 0 : index
    %c0_4 = arith.constant 0 : index
    %2 = vector.load %arg1[%c0_3, %c0_4] : memref<8x160xbf16, #tpu.memory_space<vmem>>, vector<8x24xbf16>
    %c0_5 = arith.constant 0 : index
    %c0_6 = arith.constant 0 : index
    %3 = vector.load %arg2[%c0_5, %c0_6] : memref<128x128xbf16, #tpu.memory_space<vmem>>, vector<24x128xbf16>
    %cst = arith.constant dense<0.000000e+00> : vector<8x128xf32>
    %4 = tpu.matmul %2, %3, %cst {dimension_numbers = #tpu.dot_dimension_numbers<[1], [0], [0], [1], [0, 0, 1, 1], [], []>} : vector<8x24xbf16>, vector<24x128xbf16>, vector<8x128xf32> -> vector<8x128xf32>
    %c0_7 = arith.constant 0 : index
    %c0_8 = arith.constant 0 : index
    %5 = vector.load %arg4[%c0_7, %c0_8] : memref<1x1920xf32, #tpu.memory_space<vmem>>, vector<1x128xf32>
    %6 = vector.broadcast %5 : vector<1x128xf32> to vector<8x128xf32>
    %7 = arith.addf %4, %6 : vector<8x128xf32>
    %cst_9 = arith.constant dense<0.000000e+00> : vector<8xf32>
    %8 = vector.multi_reduction <add>, %7, %cst_9 [1] : vector<8x128xf32> to vector<8xf32>
    %9 = vector.shape_cast %8 : vector<8xf32> to vector<8x1xf32>
    %cst_10 = arith.constant 7.812500e-03 : f32
    %10 = vector.broadcast %cst_10 : f32 to vector<8x1xf32>
    %11 = arith.mulf %9, %10 : vector<8x1xf32>
    %12 = vector.broadcast %11 : vector<8x1xf32> to vector<8x128xf32>
    %13 = arith.subf %7, %12 : vector<8x128xf32>
    %14 = arith.mulf %13, %13 : vector<8x128xf32>
    %cst_11 = arith.constant dense<0.000000e+00> : vector<8xf32>
    %15 = vector.multi_reduction <add>, %14, %cst_11 [1] : vector<8x128xf32> to vector<8xf32>
    %16 = vector.shape_cast %15 : vector<8xf32> to vector<8x1xf32>
    %cst_12 = arith.constant 7.812500e-03 : f32
    %17 = vector.broadcast %cst_12 : f32 to vector<8x1xf32>
    %18 = arith.mulf %16, %17 : vector<8x1xf32>
    %cst_13 = arith.constant 9.99999974E-6 : f32
    %19 = vector.broadcast %cst_13 : f32 to vector<8x1xf32>
    %20 = arith.addf %18, %19 : vector<8x1xf32>
    %21 = math.rsqrt %20 : vector<8x1xf32>
    %22 = vector.broadcast %21 : vector<8x1xf32> to vector<8x128xf32>
    %23 = arith.mulf %13, %22 : vector<8x128xf32>
    %24 = vector.broadcast %0 : vector<1x128xf32> to vector<8x128xf32>
    %25 = arith.mulf %23, %24 : vector<8x128xf32>
    %26 = vector.broadcast %1 : vector<1x128xf32> to vector<8x128xf32>
    %27 = arith.addf %25, %26 : vector<8x128xf32>
    %28 = arith.truncf %27 : vector<8x128xf32> to vector<8x128xbf16>
    %c0_14 = arith.constant 0 : index
    %c0_15 = arith.constant 0 : index
    %29 = vector.load %arg7[%c0_14, %c0_15] : memref<8x1920xbf16, #tpu.memory_space<vmem>>, vector<8x128xbf16>
    tpu.vector_store %arg7[%c0_14, %c0_15], %28 {strides = array<i32>} : memref<8x1920xbf16, #tpu.memory_space<vmem>>, vector<8x128xbf16>,
    %c0_16 = arith.constant 0 : index
    %c24 = arith.constant 24 : index
    %30 = vector.load %arg1[%c0_16, %c24] : memref<8x160xbf16, #tpu.memory_space<vmem>>, vector<8x40xbf16>
    %c24_17 = arith.constant 24 : index
    %c0_18 = arith.constant 0 : index
    %31 = vector.load %arg2[%c24_17, %c0_18] : memref<128x128xbf16, #tpu.memory_space<vmem>>, vector<40x128xbf16>
    %cst_19 = arith.constant dense<0.000000e+00> : vector<8x128xf32>
    %32 = tpu.matmul %30, %31, %cst_19 {dimension_numbers = #tpu.dot_dimension_numbers<[1], [0], [0], [1], [0, 0, 1, 1], [], []>} : vector<8x40xbf16>, vector<40x128xbf16>, vector<8x128xf32> -> vector<8x128xf32>
    %c0_20 = arith.constant 0 : index
    %c128 = arith.constant 128 : index
    %33 = vector.load %arg4[%c0_20, %c128] : memref<1x1920xf32, #tpu.memory_space<vmem>>, vector<1x128xf32>
    %34 = vector.broadcast %33 : vector<1x128xf32> to vector<8x128xf32>
    %35 = arith.addf %32, %34 : vector<8x128xf32>
    %cst_21 = arith.constant dense<0.000000e+00> : vector<8xf32>
    %36 = vector.multi_reduction <add>, %35, %cst_21 [1] : vector<8x128xf32> to vector<8xf32>
    %37 = vector.shape_cast %36 : vector<8xf32> to vector<8x1xf32>
    %cst_22 = arith.constant 7.812500e-03 : f32
    %38 = vector.broadcast %cst_22 : f32 to vector<8x1xf32>
    %39 = arith.mulf %37, %38 : vector<8x1xf32>
    %40 = vector.broadcast %39 : vector<8x1xf32> to vector<8x128xf32>
    %41 = arith.subf %35, %40 : vector<8x128xf32>
    %42 = arith.mulf %41, %41 : vector<8x128xf32>
    %cst_23 = arith.constant dense<0.000000e+00> : vector<8xf32>
    %43 = vector.multi_reduction <add>, %42, %cst_23 [1] : vector<8x128xf32> to vector<8xf32>
    %44 = vector.shape_cast %43 : vector<8xf32> to vector<8x1xf32>
    %cst_24 = arith.constant 7.812500e-03 : f32
    %45 = vector.broadcast %cst_24 : f32 to vector<8x1xf32>
    %46 = arith.mulf %44, %45 : vector<8x1xf32>
    %cst_25 = arith.constant 9.99999974E-6 : f32
    %47 = vector.broadcast %cst_25 : f32 to vector<8x1xf32>
    %48 = arith.addf %46, %47 : vector<8x1xf32>
    %49 = math.rsqrt %48 : vector<8x1xf32>
    %50 = vector.broadcast %49 : vector<8x1xf32> to vector<8x128xf32>
    %51 = arith.mulf %41, %50 : vector<8x128xf32>
    %52 = vector.broadcast %0 : vector<1x128xf32> to vector<8x128xf32>
    %53 = arith.mulf %51, %52 : vector<8x128xf32>
    %54 = vector.broadcast %1 : vector<1x128xf32> to vector<8x128xf32>
    %55 = arith.addf %53, %54 : vector<8x128xf32>
    %56 = arith.truncf %55 : vector<8x128xf32> to vector<8x128xbf16>
    %c0_26 = arith.constant 0 : index
    %c128_27 = arith.constant 128 : index
    %57 = vector.load %arg7[%c0_26, %c128_27] : memref<8x1920xbf16, #tpu.memory_space<vmem>>, vector<8x128xbf16>
    tpu.vector_store %arg7[%c0_26, %c128_27], %56 {strides = array<i32>} : memref<8x1920xbf16, #tpu.memory_space<vmem>>, vector<8x128xbf16>,
    %c0_28 = arith.constant 0 : index
    %c64 = arith.constant 64 : index
    %58 = vector.load %arg1[%c0_28, %c64] : memref<8x160xbf16, #tpu.memory_space<vmem>>, vector<8x32xbf16>
    %c64_29 = arith.constant 64 : index
    %c0_30 = arith.constant 0 : index
    %59 = vector.load %arg2[%c64_29, %c0_30] : memref<128x128xbf16, #tpu.memory_space<vmem>>, vector<32x128xbf16>
    %cst_31 = arith.constant dense<0.000000e+00> : vector<8x128xf32>
    %60 = tpu.matmul %58, %59, %cst_31 {dimension_numbers = #tpu.dot_dimension_numbers<[1], [0], [0], [1], [0, 0, 1, 1], [], []>} : vector<8x32xbf16>, vector<32x128xbf16>, vector<8x128xf32> -> vector<8x128xf32>
    %c0_32 = arith.constant 0 : index
    %c256 = arith.constant 256 : index
    %61 = vector.load %arg4[%c0_32, %c256] : memref<1x1920xf32, #tpu.memory_space<vmem>>, vector<1x128xf32>
    %62 = vector.broadcast %61 : vector<1x128xf32> to vector<8x128xf32>
    %63 = arith.addf %60, %62 : vector<8x128xf32>
    %cst_33 = arith.constant dense<0.000000e+00> : vector<8xf32>
    %64 = vector.multi_reduction <add>, %63, %cst_33 [1] : vector<8x128xf32> to vector<8xf32>
    %65 = vector.shape_cast %64 : vector<8xf32> to vector<8x1xf32>
    %cst_34 = arith.constant 7.812500e-03 : f32
    %66 = vector.broadcast %cst_34 : f32 to vector<8x1xf32>
    %67 = arith.mulf %65, %66 : vector<8x1xf32>
    %68 = vector.broadcast %67 : vector<8x1xf32> to vector<8x128xf32>
    %69 = arith.subf %63, %68 : vector<8x128xf32>
    %70 = arith.mulf %69, %69 : vector<8x128xf32>
    %cst_35 = arith.constant dense<0.000000e+00> : vector<8xf32>
    %71 = vector.multi_reduction <add>, %70, %cst_35 [1] : vector<8x128xf32> to vector<8xf32>
    %72 = vector.shape_cast %71 : vector<8xf32> to vector<8x1xf32>
    %cst_36 = arith.constant 7.812500e-03 : f32
    %73 = vector.broadcast %cst_36 : f32 to vector<8x1xf32>
    %74 = arith.mulf %72, %73 : vector<8x1xf32>
    %cst_37 = arith.constant 9.99999974E-6 : f32
    %75 = vector.broadcast %cst_37 : f32 to vector<8x1xf32>
    %76 = arith.addf %74, %75 : vector<8x1xf32>
    %77 = math.rsqrt %76 : vector<8x1xf32>
    %78 = vector.broadcast %77 : vector<8x1xf32> to vector<8x128xf32>
    %79 = arith.mulf %69, %78 : vector<8x128xf32>
    %80 = vector.broadcast %0 : vector<1x128xf32> to vector<8x128xf32>
    %81 = arith.mulf %79, %80 : vector<8x128xf32>
    %82 = vector.broadcast %1 : vector<1x128xf32> to vector<8x128xf32>
    %83 = arith.addf %81, %82 : vector<8x128xf32>
    %84 = arith.truncf %83 : vector<8x128xf32> to vector<8x128xbf16>
    %c0_38 = arith.constant 0 : index
    %c256_39 = arith.constant 256 : index
    %85 = vector.load %arg7[%c0_38, %c256_39] : memref<8x1920xbf16, #tpu.memory_space<vmem>>, vector<8x128xbf16>
    tpu.vector_store %arg7[%c0_38, %c256_39], %84 {strides = array<i32>} : memref<8x1920xbf16, #tpu.memory_space<vmem>>, vector<8x128xbf16>,
    %c0_40 = arith.constant 0 : index
    %c96 = arith.constant 96 : index
    %86 = vector.load %arg1[%c0_40, %c96] : memref<8x160xbf16, #tpu.memory_space<vmem>>, vector<8x8xbf16>
    %c96_41 = arith.constant 96 : index
    %c0_42 = arith.constant 0 : index
    %87 = vector.load %arg2[%c96_41, %c0_42] : memref<128x128xbf16, #tpu.memory_space<vmem>>, vector<8x128xbf16>
    %cst_43 = arith.constant dense<0.000000e+00> : vector<8x128xf32>
    %88 = tpu.matmul %86, %87, %cst_43 {dimension_numbers = #tpu.dot_dimension_numbers<[1], [0], [0], [1], [0, 0, 1, 1], [], []>} : vector<8x8xbf16>, vector<8x128xbf16>, vector<8x128xf32> -> vector<8x128xf32>
    %c0_44 = arith.constant 0 : index
    %c384 = arith.constant 384 : index
    %89 = vector.load %arg4[%c0_44, %c384] : memref<1x1920xf32, #tpu.memory_space<vmem>>, vector<1x128xf32>
    %90 = vector.broadcast %89 : vector<1x128xf32> to vector<8x128xf32>
    %91 = arith.addf %88, %90 : vector<8x128xf32>
    %cst_45 = arith.constant dense<0.000000e+00> : vector<8xf32>
    %92 = vector.multi_reduction <add>, %91, %cst_45 [1] : vector<8x128xf32> to vector<8xf32>
    %93 = vector.shape_cast %92 : vector<8xf32> to vector<8x1xf32>
    %cst_46 = arith.constant 7.812500e-03 : f32
    %94 = vector.broadcast %cst_46 : f32 to vector<8x1xf32>
    %95 = arith.mulf %93, %94 : vector<8x1xf32>
    %96 = vector.broadcast %95 : vector<8x1xf32> to vector<8x128xf32>
    %97 = arith.subf %91, %96 : vector<8x128xf32>
    %98 = arith.mulf %97, %97 : vector<8x128xf32>
    %cst_47 = arith.constant dense<0.000000e+00> : vector<8xf32>
    %99 = vector.multi_reduction <add>, %98, %cst_47 [1] : vector<8x128xf32> to vector<8xf32>
    %100 = vector.shape_cast %99 : vector<8xf32> to vector<8x1xf32>
    %cst_48 = arith.constant 7.812500e-03 : f32
    %101 = vector.broadcast %cst_48 : f32 to vector<8x1xf32>
    %102 = arith.mulf %100, %101 : vector<8x1xf32>
    %cst_49 = arith.constant 9.99999974E-6 : f32
    %103 = vector.broadcast %cst_49 : f32 to vector<8x1xf32>
    %104 = arith.addf %102, %103 : vector<8x1xf32>
    %105 = math.rsqrt %104 : vector<8x1xf32>
    %106 = vector.broadcast %105 : vector<8x1xf32> to vector<8x128xf32>
    %107 = arith.mulf %97, %106 : vector<8x128xf32>
    %108 = vector.broadcast %0 : vector<1x128xf32> to vector<8x128xf32>
    %109 = arith.mulf %107, %108 : vector<8x128xf32>
    %110 = vector.broadcast %1 : vector<1x128xf32> to vector<8x128xf32>
    %111 = arith.addf %109, %110 : vector<8x128xf32>
    %112 = arith.truncf %111 : vector<8x128xf32> to vector<8x128xbf16>
    %c0_50 = arith.constant 0 : index
    %c384_51 = arith.constant 384 : index
    %113 = vector.load %arg7[%c0_50, %c384_51] : memref<8x1920xbf16, #tpu.memory_space<vmem>>, vector<8x128xbf16>
    tpu.vector_store %arg7[%c0_50, %c384_51], %112 {strides = array<i32>} : memref<8x1920xbf16, #tpu.memory_space<vmem>>, vector<8x128xbf16>,
    %c0_52 = arith.constant 0 : index
    %c104 = arith.constant 104 : index
    %114 = vector.load %arg1[%c0_52, %c104] : memref<8x160xbf16, #tpu.memory_space<vmem>>, vector<8x8xbf16>
    %c104_53 = arith.constant 104 : index
    %c0_54 = arith.constant 0 : index
    %115 = vector.load %arg2[%c104_53, %c0_54] : memref<128x128xbf16, #tpu.memory_space<vmem>>, vector<8x128xbf16>
    %cst_55 = arith.constant dense<0.000000e+00> : vector<8x128xf32>
    %116 = tpu.matmul %114, %115, %cst_55 {dimension_numbers = #tpu.dot_dimension_numbers<[1], [0], [0], [1], [0, 0, 1, 1], [], []>} : vector<8x8xbf16>, vector<8x128xbf16>, vector<8x128xf32> -> vector<8x128xf32>
    %c0_56 = arith.constant 0 : index
    %c512 = arith.constant 512 : index
    %117 = vector.load %arg4[%c0_56, %c512] : memref<1x1920xf32, #tpu.memory_space<vmem>>, vector<1x128xf32>
    %118 = vector.broadcast %117 : vector<1x128xf32> to vector<8x128xf32>
    %119 = arith.addf %116, %118 : vector<8x128xf32>
    %cst_57 = arith.constant dense<0.000000e+00> : vector<8xf32>
    %120 = vector.multi_reduction <add>, %119, %cst_57 [1] : vector<8x128xf32> to vector<8xf32>
    %121 = vector.shape_cast %120 : vector<8xf32> to vector<8x1xf32>
    %cst_58 = arith.constant 7.812500e-03 : f32
    %122 = vector.broadcast %cst_58 : f32 to vector<8x1xf32>
    %123 = arith.mulf %121, %122 : vector<8x1xf32>
    %124 = vector.broadcast %123 : vector<8x1xf32> to vector<8x128xf32>
    %125 = arith.subf %119, %124 : vector<8x128xf32>
    %126 = arith.mulf %125, %125 : vector<8x128xf32>
    %cst_59 = arith.constant dense<0.000000e+00> : vector<8xf32>
    %127 = vector.multi_reduction <add>, %126, %cst_59 [1] : vector<8x128xf32> to vector<8xf32>
    %128 = vector.shape_cast %127 : vector<8xf32> to vector<8x1xf32>
    %cst_60 = arith.constant 7.812500e-03 : f32
    %129 = vector.broadcast %cst_60 : f32 to vector<8x1xf32>
    %130 = arith.mulf %128, %129 : vector<8x1xf32>
    %cst_61 = arith.constant 9.99999974E-6 : f32
    %131 = vector.broadcast %cst_61 : f32 to vector<8x1xf32>
    %132 = arith.addf %130, %131 : vector<8x1xf32>
    %133 = math.rsqrt %132 : vector<8x1xf32>
    %134 = vector.broadcast %133 : vector<8x1xf32> to vector<8x128xf32>
    %135 = arith.mulf %125, %134 : vector<8x128xf32>
    %136 = vector.broadcast %0 : vector<1x128xf32> to vector<8x128xf32>
    %137 = arith.mulf %135, %136 : vector<8x128xf32>
    %138 = vector.broadcast %1 : vector<1x128xf32> to vector<8x128xf32>
    %139 = arith.addf %137, %138 : vector<8x128xf32>
    %140 = arith.truncf %139 : vector<8x128xf32> to vector<8x128xbf16>
    %c0_62 = arith.constant 0 : index
    %c512_63 = arith.constant 512 : index
    %141 = vector.load %arg7[%c0_62, %c512_63] : memref<8x1920xbf16, #tpu.memory_space<vmem>>, vector<8x128xbf16>
    tpu.vector_store %arg7[%c0_62, %c512_63], %140 {strides = array<i32>} : memref<8x1920xbf16, #tpu.memory_space<vmem>>, vector<8x128xbf16>,
    %c0_64 = arith.constant 0 : index
    %c112 = arith.constant 112 : index
    %142 = vector.load %arg1[%c0_64, %c112] : memref<8x160xbf16, #tpu.memory_space<vmem>>, vector<8x8xbf16>
    %c112_65 = arith.constant 112 : index
    %c0_66 = arith.constant 0 : index
    %143 = vector.load %arg2[%c112_65, %c0_66] : memref<128x128xbf16, #tpu.memory_space<vmem>>, vector<8x128xbf16>
    %cst_67 = arith.constant dense<0.000000e+00> : vector<8x128xf32>
    %144 = tpu.matmul %142, %143, %cst_67 {dimension_numbers = #tpu.dot_dimension_numbers<[1], [0], [0], [1], [0, 0, 1, 1], [], []>} : vector<8x8xbf16>, vector<8x128xbf16>, vector<8x128xf32> -> vector<8x128xf32>
    %c0_68 = arith.constant 0 : index
    %c640 = arith.constant 640 : index
    %145 = vector.load %arg4[%c0_68, %c640] : memref<1x1920xf32, #tpu.memory_space<vmem>>, vector<1x128xf32>
    %146 = vector.broadcast %145 : vector<1x128xf32> to vector<8x128xf32>
    %147 = arith.addf %144, %146 : vector<8x128xf32>
    %cst_69 = arith.constant dense<0.000000e+00> : vector<8xf32>
    %148 = vector.multi_reduction <add>, %147, %cst_69 [1] : vector<8x128xf32> to vector<8xf32>
    %149 = vector.shape_cast %148 : vector<8xf32> to vector<8x1xf32>
    %cst_70 = arith.constant 7.812500e-03 : f32
    %150 = vector.broadcast %cst_70 : f32 to vector<8x1xf32>
    %151 = arith.mulf %149, %150 : vector<8x1xf32>
    %152 = vector.broadcast %151 : vector<8x1xf32> to vector<8x128xf32>
    %153 = arith.subf %147, %152 : vector<8x128xf32>
    %154 = arith.mulf %153, %153 : vector<8x128xf32>
    %cst_71 = arith.constant dense<0.000000e+00> : vector<8xf32>
    %155 = vector.multi_reduction <add>, %154, %cst_71 [1] : vector<8x128xf32> to vector<8xf32>
    %156 = vector.shape_cast %155 : vector<8xf32> to vector<8x1xf32>
    %cst_72 = arith.constant 7.812500e-03 : f32
    %157 = vector.broadcast %cst_72 : f32 to vector<8x1xf32>
    %158 = arith.mulf %156, %157 : vector<8x1xf32>
    %cst_73 = arith.constant 9.99999974E-6 : f32
    %159 = vector.broadcast %cst_73 : f32 to vector<8x1xf32>
    %160 = arith.addf %158, %159 : vector<8x1xf32>
    %161 = math.rsqrt %160 : vector<8x1xf32>
    %162 = vector.broadcast %161 : vector<8x1xf32> to vector<8x128xf32>
    %163 = arith.mulf %153, %162 : vector<8x128xf32>
    %164 = vector.broadcast %0 : vector<1x128xf32> to vector<8x128xf32>
    %165 = arith.mulf %163, %164 : vector<8x128xf32>
    %166 = vector.broadcast %1 : vector<1x128xf32> to vector<8x128xf32>
    %167 = arith.addf %165, %166 : vector<8x128xf32>
    %168 = arith.truncf %167 : vector<8x128xf32> to vector<8x128xbf16>
    %c0_74 = arith.constant 0 : index
    %c640_75 = arith.constant 640 : index
    %169 = vector.load %arg7[%c0_74, %c640_75] : memref<8x1920xbf16, #tpu.memory_space<vmem>>, vector<8x128xbf16>
    tpu.vector_store %arg7[%c0_74, %c640_75], %168 {strides = array<i32>} : memref<8x1920xbf16, #tpu.memory_space<vmem>>, vector<8x128xbf16>,
    %c0_76 = arith.constant 0 : index
    %c120 = arith.constant 120 : index
    %170 = vector.load %arg1[%c0_76, %c120] : memref<8x160xbf16, #tpu.memory_space<vmem>>, vector<8x8xbf16>
    %c120_77 = arith.constant 120 : index
    %c0_78 = arith.constant 0 : index
    %171 = vector.load %arg2[%c120_77, %c0_78] : memref<128x128xbf16, #tpu.memory_space<vmem>>, vector<8x128xbf16>
    %cst_79 = arith.constant dense<0.000000e+00> : vector<8x128xf32>
    %172 = tpu.matmul %170, %171, %cst_79 {dimension_numbers = #tpu.dot_dimension_numbers<[1], [0], [0], [1], [0, 0, 1, 1], [], []>} : vector<8x8xbf16>, vector<8x128xbf16>, vector<8x128xf32> -> vector<8x128xf32>
    %c0_80 = arith.constant 0 : index
    %c768 = arith.constant 768 : index
    %173 = vector.load %arg4[%c0_80, %c768] : memref<1x1920xf32, #tpu.memory_space<vmem>>, vector<1x128xf32>
    %174 = vector.broadcast %173 : vector<1x128xf32> to vector<8x128xf32>
    %175 = arith.addf %172, %174 : vector<8x128xf32>
    %cst_81 = arith.constant dense<0.000000e+00> : vector<8xf32>
    %176 = vector.multi_reduction <add>, %175, %cst_81 [1] : vector<8x128xf32> to vector<8xf32>
    %177 = vector.shape_cast %176 : vector<8xf32> to vector<8x1xf32>
    %cst_82 = arith.constant 7.812500e-03 : f32
    %178 = vector.broadcast %cst_82 : f32 to vector<8x1xf32>
    %179 = arith.mulf %177, %178 : vector<8x1xf32>
    %180 = vector.broadcast %179 : vector<8x1xf32> to vector<8x128xf32>
    %181 = arith.subf %175, %180 : vector<8x128xf32>
    %182 = arith.mulf %181, %181 : vector<8x128xf32>
    %cst_83 = arith.constant dense<0.000000e+00> : vector<8xf32>
    %183 = vector.multi_reduction <add>, %182, %cst_83 [1] : vector<8x128xf32> to vector<8xf32>
    %184 = vector.shape_cast %183 : vector<8xf32> to vector<8x1xf32>
    %cst_84 = arith.constant 7.812500e-03 : f32
    %185 = vector.broadcast %cst_84 : f32 to vector<8x1xf32>
    %186 = arith.mulf %184, %185 : vector<8x1xf32>
    %cst_85 = arith.constant 9.99999974E-6 : f32
    %187 = vector.broadcast %cst_85 : f32 to vector<8x1xf32>
    %188 = arith.addf %186, %187 : vector<8x1xf32>
    %189 = math.rsqrt %188 : vector<8x1xf32>
    %190 = vector.broadcast %189 : vector<8x1xf32> to vector<8x128xf32>
    %191 = arith.mulf %181, %190 : vector<8x128xf32>
    %192 = vector.broadcast %0 : vector<1x128xf32> to vector<8x128xf32>
    %193 = arith.mulf %191, %192 : vector<8x128xf32>
    %194 = vector.broadcast %1 : vector<1x128xf32> to vector<8x128xf32>
    %195 = arith.addf %193, %194 : vector<8x128xf32>
    %196 = arith.truncf %195 : vector<8x128xf32> to vector<8x128xbf16>
    %c0_86 = arith.constant 0 : index
    %c768_87 = arith.constant 768 : index
    %197 = vector.load %arg7[%c0_86, %c768_87] : memref<8x1920xbf16, #tpu.memory_space<vmem>>, vector<8x128xbf16>
    tpu.vector_store %arg7[%c0_86, %c768_87], %196 {strides = array<i32>} : memref<8x1920xbf16, #tpu.memory_space<vmem>>, vector<8x128xbf16>,
    %c0_88 = arith.constant 0 : index
    %c128_89 = arith.constant 128 : index
    %198 = vector.load %arg1[%c0_88, %c128_89] : memref<8x160xbf16, #tpu.memory_space<vmem>>, vector<8x32xbf16>
    %c0_90 = arith.constant 0 : index
    %c0_91 = arith.constant 0 : index
    %199 = vector.load %arg3[%c0_90, %c0_91] : memref<32x1024xbf16, #tpu.memory_space<vmem>>, vector<32x1024xbf16>
    %cst_92 = arith.constant dense<0.000000e+00> : vector<8x1024xf32>
    %200 = tpu.matmul %198, %199, %cst_92 {dimension_numbers = #tpu.dot_dimension_numbers<[1], [0], [0], [1], [0, 0, 1, 1], [], []>} : vector<8x32xbf16>, vector<32x1024xbf16>, vector<8x1024xf32> -> vector<8x1024xf32>
    %c0_93 = arith.constant 0 : index
    %c896 = arith.constant 896 : index
    %201 = vector.load %arg4[%c0_93, %c896] : memref<1x1920xf32, #tpu.memory_space<vmem>>, vector<1x1024xf32>
    %202 = vector.broadcast %201 : vector<1x1024xf32> to vector<8x1024xf32>
    %203 = arith.addf %200, %202 : vector<8x1024xf32>
    %204 = vector.extract_strided_slice %203 {offsets = [0, 0], sizes = [8, 128], strides = [1, 1]} : vector<8x1024xf32> to vector<8x128xf32>
    %cst_94 = arith.constant dense<0.000000e+00> : vector<8xf32>
    %205 = vector.multi_reduction <add>, %204, %cst_94 [1] : vector<8x128xf32> to vector<8xf32>
    %206 = vector.shape_cast %205 : vector<8xf32> to vector<8x1xf32>
    %cst_95 = arith.constant 7.812500e-03 : f32
    %207 = vector.broadcast %cst_95 : f32 to vector<8x1xf32>
    %208 = arith.mulf %206, %207 : vector<8x1xf32>
    %209 = vector.broadcast %208 : vector<8x1xf32> to vector<8x128xf32>
    %210 = arith.subf %204, %209 : vector<8x128xf32>
    %211 = arith.mulf %210, %210 : vector<8x128xf32>
    %cst_96 = arith.constant dense<0.000000e+00> : vector<8xf32>
    %212 = vector.multi_reduction <add>, %211, %cst_96 [1] : vector<8x128xf32> to vector<8xf32>
    %213 = vector.shape_cast %212 : vector<8xf32> to vector<8x1xf32>
    %cst_97 = arith.constant 7.812500e-03 : f32
    %214 = vector.broadcast %cst_97 : f32 to vector<8x1xf32>
    %215 = arith.mulf %213, %214 : vector<8x1xf32>
    %cst_98 = arith.constant 9.99999974E-6 : f32
    %216 = vector.broadcast %cst_98 : f32 to vector<8x1xf32>
    %217 = arith.addf %215, %216 : vector<8x1xf32>
    %218 = math.rsqrt %217 : vector<8x1xf32>
    %219 = vector.broadcast %218 : vector<8x1xf32> to vector<8x128xf32>
    %220 = arith.mulf %210, %219 : vector<8x128xf32>
    %221 = vector.broadcast %0 : vector<1x128xf32> to vector<8x128xf32>
    %222 = arith.mulf %220, %221 : vector<8x128xf32>
    %223 = vector.broadcast %1 : vector<1x128xf32> to vector<8x128xf32>
    %224 = arith.addf %222, %223 : vector<8x128xf32>
    %225 = arith.truncf %224 : vector<8x128xf32> to vector<8x128xbf16>
    %c0_99 = arith.constant 0 : index
    %c896_100 = arith.constant 896 : index
    %226 = vector.load %arg7[%c0_99, %c896_100] : memref<8x1920xbf16, #tpu.memory_space<vmem>>, vector<8x128xbf16>
    tpu.vector_store %arg7[%c0_99, %c896_100], %225 {strides = array<i32>} : memref<8x1920xbf16, #tpu.memory_space<vmem>>, vector<8x128xbf16>,
    %227 = vector.extract_strided_slice %203 {offsets = [0, 128], sizes = [8, 128], strides = [1, 1]} : vector<8x1024xf32> to vector<8x128xf32>
    %cst_101 = arith.constant dense<0.000000e+00> : vector<8xf32>
    %228 = vector.multi_reduction <add>, %227, %cst_101 [1] : vector<8x128xf32> to vector<8xf32>
    %229 = vector.shape_cast %228 : vector<8xf32> to vector<8x1xf32>
    %cst_102 = arith.constant 7.812500e-03 : f32
    %230 = vector.broadcast %cst_102 : f32 to vector<8x1xf32>
    %231 = arith.mulf %229, %230 : vector<8x1xf32>
    %232 = vector.broadcast %231 : vector<8x1xf32> to vector<8x128xf32>
    %233 = arith.subf %227, %232 : vector<8x128xf32>
    %234 = arith.mulf %233, %233 : vector<8x128xf32>
    %cst_103 = arith.constant dense<0.000000e+00> : vector<8xf32>
    %235 = vector.multi_reduction <add>, %234, %cst_103 [1] : vector<8x128xf32> to vector<8xf32>
    %236 = vector.shape_cast %235 : vector<8xf32> to vector<8x1xf32>
    %cst_104 = arith.constant 7.812500e-03 : f32
    %237 = vector.broadcast %cst_104 : f32 to vector<8x1xf32>
    %238 = arith.mulf %236, %237 : vector<8x1xf32>
    %cst_105 = arith.constant 9.99999974E-6 : f32
    %239 = vector.broadcast %cst_105 : f32 to vector<8x1xf32>
    %240 = arith.addf %238, %239 : vector<8x1xf32>
    %241 = math.rsqrt %240 : vector<8x1xf32>
    %242 = vector.broadcast %241 : vector<8x1xf32> to vector<8x128xf32>
    %243 = arith.mulf %233, %242 : vector<8x128xf32>
    %244 = vector.broadcast %0 : vector<1x128xf32> to vector<8x128xf32>
    %245 = arith.mulf %243, %244 : vector<8x128xf32>
    %246 = vector.broadcast %1 : vector<1x128xf32> to vector<8x128xf32>
    %247 = arith.addf %245, %246 : vector<8x128xf32>
    %248 = arith.truncf %247 : vector<8x128xf32> to vector<8x128xbf16>
    %c0_106 = arith.constant 0 : index
    %c1024 = arith.constant 1024 : index
    %249 = vector.load %arg7[%c0_106, %c1024] : memref<8x1920xbf16, #tpu.memory_space<vmem>>, vector<8x128xbf16>
    tpu.vector_store %arg7[%c0_106, %c1024], %248 {strides = array<i32>} : memref<8x1920xbf16, #tpu.memory_space<vmem>>, vector<8x128xbf16>,
    %250 = vector.extract_strided_slice %203 {offsets = [0, 256], sizes = [8, 128], strides = [1, 1]} : vector<8x1024xf32> to vector<8x128xf32>
    %cst_107 = arith.constant dense<0.000000e+00> : vector<8xf32>
    %251 = vector.multi_reduction <add>, %250, %cst_107 [1] : vector<8x128xf32> to vector<8xf32>
    %252 = vector.shape_cast %251 : vector<8xf32> to vector<8x1xf32>
    %cst_108 = arith.constant 7.812500e-03 : f32
    %253 = vector.broadcast %cst_108 : f32 to vector<8x1xf32>
    %254 = arith.mulf %252, %253 : vector<8x1xf32>
    %255 = vector.broadcast %254 : vector<8x1xf32> to vector<8x128xf32>
    %256 = arith.subf %250, %255 : vector<8x128xf32>
    %257 = arith.mulf %256, %256 : vector<8x128xf32>
    %cst_109 = arith.constant dense<0.000000e+00> : vector<8xf32>
    %258 = vector.multi_reduction <add>, %257, %cst_109 [1] : vector<8x128xf32> to vector<8xf32>
    %259 = vector.shape_cast %258 : vector<8xf32> to vector<8x1xf32>
    %cst_110 = arith.constant 7.812500e-03 : f32
    %260 = vector.broadcast %cst_110 : f32 to vector<8x1xf32>
    %261 = arith.mulf %259, %260 : vector<8x1xf32>
    %cst_111 = arith.constant 9.99999974E-6 : f32
    %262 = vector.broadcast %cst_111 : f32 to vector<8x1xf32>
    %263 = arith.addf %261, %262 : vector<8x1xf32>
    %264 = math.rsqrt %263 : vector<8x1xf32>
    %265 = vector.broadcast %264 : vector<8x1xf32> to vector<8x128xf32>
    %266 = arith.mulf %256, %265 : vector<8x128xf32>
    %267 = vector.broadcast %0 : vector<1x128xf32> to vector<8x128xf32>
    %268 = arith.mulf %266, %267 : vector<8x128xf32>
    %269 = vector.broadcast %1 : vector<1x128xf32> to vector<8x128xf32>
    %270 = arith.addf %268, %269 : vector<8x128xf32>
    %271 = arith.truncf %270 : vector<8x128xf32> to vector<8x128xbf16>
    %c0_112 = arith.constant 0 : index
    %c1152 = arith.constant 1152 : index
    %272 = vector.load %arg7[%c0_112, %c1152] : memref<8x1920xbf16, #tpu.memory_space<vmem>>, vector<8x128xbf16>
    tpu.vector_store %arg7[%c0_112, %c1152], %271 {strides = array<i32>} : memref<8x1920xbf16, #tpu.memory_space<vmem>>, vector<8x128xbf16>,
    %273 = vector.extract_strided_slice %203 {offsets = [0, 384], sizes = [8, 128], strides = [1, 1]} : vector<8x1024xf32> to vector<8x128xf32>
    %cst_113 = arith.constant dense<0.000000e+00> : vector<8xf32>
    %274 = vector.multi_reduction <add>, %273, %cst_113 [1] : vector<8x128xf32> to vector<8xf32>
    %275 = vector.shape_cast %274 : vector<8xf32> to vector<8x1xf32>
    %cst_114 = arith.constant 7.812500e-03 : f32
    %276 = vector.broadcast %cst_114 : f32 to vector<8x1xf32>
    %277 = arith.mulf %275, %276 : vector<8x1xf32>
    %278 = vector.broadcast %277 : vector<8x1xf32> to vector<8x128xf32>
    %279 = arith.subf %273, %278 : vector<8x128xf32>
    %280 = arith.mulf %279, %279 : vector<8x128xf32>
    %cst_115 = arith.constant dense<0.000000e+00> : vector<8xf32>
    %281 = vector.multi_reduction <add>, %280, %cst_115 [1] : vector<8x128xf32> to vector<8xf32>
    %282 = vector.shape_cast %281 : vector<8xf32> to vector<8x1xf32>
    %cst_116 = arith.constant 7.812500e-03 : f32
    %283 = vector.broadcast %cst_116 : f32 to vector<8x1xf32>
    %284 = arith.mulf %282, %283 : vector<8x1xf32>
    %cst_117 = arith.constant 9.99999974E-6 : f32
    %285 = vector.broadcast %cst_117 : f32 to vector<8x1xf32>
    %286 = arith.addf %284, %285 : vector<8x1xf32>
    %287 = math.rsqrt %286 : vector<8x1xf32>
    %288 = vector.broadcast %287 : vector<8x1xf32> to vector<8x128xf32>
    %289 = arith.mulf %279, %288 : vector<8x128xf32>
    %290 = vector.broadcast %0 : vector<1x128xf32> to vector<8x128xf32>
    %291 = arith.mulf %289, %290 : vector<8x128xf32>
    %292 = vector.broadcast %1 : vector<1x128xf32> to vector<8x128xf32>
    %293 = arith.addf %291, %292 : vector<8x128xf32>
    %294 = arith.truncf %293 : vector<8x128xf32> to vector<8x128xbf16>
    %c0_118 = arith.constant 0 : index
    %c1280 = arith.constant 1280 : index
    %295 = vector.load %arg7[%c0_118, %c1280] : memref<8x1920xbf16, #tpu.memory_space<vmem>>, vector<8x128xbf16>
    tpu.vector_store %arg7[%c0_118, %c1280], %294 {strides = array<i32>} : memref<8x1920xbf16, #tpu.memory_space<vmem>>, vector<8x128xbf16>,
    %296 = vector.extract_strided_slice %203 {offsets = [0, 512], sizes = [8, 128], strides = [1, 1]} : vector<8x1024xf32> to vector<8x128xf32>
    %cst_119 = arith.constant dense<0.000000e+00> : vector<8xf32>
    %297 = vector.multi_reduction <add>, %296, %cst_119 [1] : vector<8x128xf32> to vector<8xf32>
    %298 = vector.shape_cast %297 : vector<8xf32> to vector<8x1xf32>
    %cst_120 = arith.constant 7.812500e-03 : f32
    %299 = vector.broadcast %cst_120 : f32 to vector<8x1xf32>
    %300 = arith.mulf %298, %299 : vector<8x1xf32>
    %301 = vector.broadcast %300 : vector<8x1xf32> to vector<8x128xf32>
    %302 = arith.subf %296, %301 : vector<8x128xf32>
    %303 = arith.mulf %302, %302 : vector<8x128xf32>
    %cst_121 = arith.constant dense<0.000000e+00> : vector<8xf32>
    %304 = vector.multi_reduction <add>, %303, %cst_121 [1] : vector<8x128xf32> to vector<8xf32>
    %305 = vector.shape_cast %304 : vector<8xf32> to vector<8x1xf32>
    %cst_122 = arith.constant 7.812500e-03 : f32
    %306 = vector.broadcast %cst_122 : f32 to vector<8x1xf32>
    %307 = arith.mulf %305, %306 : vector<8x1xf32>
    %cst_123 = arith.constant 9.99999974E-6 : f32
    %308 = vector.broadcast %cst_123 : f32 to vector<8x1xf32>
    %309 = arith.addf %307, %308 : vector<8x1xf32>
    %310 = math.rsqrt %309 : vector<8x1xf32>
    %311 = vector.broadcast %310 : vector<8x1xf32> to vector<8x128xf32>
    %312 = arith.mulf %302, %311 : vector<8x128xf32>
    %313 = vector.broadcast %0 : vector<1x128xf32> to vector<8x128xf32>
    %314 = arith.mulf %312, %313 : vector<8x128xf32>
    %315 = vector.broadcast %1 : vector<1x128xf32> to vector<8x128xf32>
    %316 = arith.addf %314, %315 : vector<8x128xf32>
    %317 = arith.truncf %316 : vector<8x128xf32> to vector<8x128xbf16>
    %c0_124 = arith.constant 0 : index
    %c1408 = arith.constant 1408 : index
    %318 = vector.load %arg7[%c0_124, %c1408] : memref<8x1920xbf16, #tpu.memory_space<vmem>>, vector<8x128xbf16>
    tpu.vector_store %arg7[%c0_124, %c1408], %317 {strides = array<i32>} : memref<8x1920xbf16, #tpu.memory_space<vmem>>, vector<8x128xbf16>,
    %319 = vector.extract_strided_slice %203 {offsets = [0, 640], sizes = [8, 128], strides = [1, 1]} : vector<8x1024xf32> to vector<8x128xf32>
    %cst_125 = arith.constant dense<0.000000e+00> : vector<8xf32>
    %320 = vector.multi_reduction <add>, %319, %cst_125 [1] : vector<8x128xf32> to vector<8xf32>
    %321 = vector.shape_cast %320 : vector<8xf32> to vector<8x1xf32>
    %cst_126 = arith.constant 7.812500e-03 : f32
    %322 = vector.broadcast %cst_126 : f32 to vector<8x1xf32>
    %323 = arith.mulf %321, %322 : vector<8x1xf32>
    %324 = vector.broadcast %323 : vector<8x1xf32> to vector<8x128xf32>
    %325 = arith.subf %319, %324 : vector<8x128xf32>
    %326 = arith.mulf %325, %325 : vector<8x128xf32>
    %cst_127 = arith.constant dense<0.000000e+00> : vector<8xf32>
    %327 = vector.multi_reduction <add>, %326, %cst_127 [1] : vector<8x128xf32> to vector<8xf32>
    %328 = vector.shape_cast %327 : vector<8xf32> to vector<8x1xf32>
    %cst_128 = arith.constant 7.812500e-03 : f32
    %329 = vector.broadcast %cst_128 : f32 to vector<8x1xf32>
    %330 = arith.mulf %328, %329 : vector<8x1xf32>
    %cst_129 = arith.constant 9.99999974E-6 : f32
    %331 = vector.broadcast %cst_129 : f32 to vector<8x1xf32>
    %332 = arith.addf %330, %331 : vector<8x1xf32>
    %333 = math.rsqrt %332 : vector<8x1xf32>
    %334 = vector.broadcast %333 : vector<8x1xf32> to vector<8x128xf32>
    %335 = arith.mulf %325, %334 : vector<8x128xf32>
    %336 = vector.broadcast %0 : vector<1x128xf32> to vector<8x128xf32>
    %337 = arith.mulf %335, %336 : vector<8x128xf32>
    %338 = vector.broadcast %1 : vector<1x128xf32> to vector<8x128xf32>
    %339 = arith.addf %337, %338 : vector<8x128xf32>
    %340 = arith.truncf %339 : vector<8x128xf32> to vector<8x128xbf16>
    %c0_130 = arith.constant 0 : index
    %c1536 = arith.constant 1536 : index
    %341 = vector.load %arg7[%c0_130, %c1536] : memref<8x1920xbf16, #tpu.memory_space<vmem>>, vector<8x128xbf16>
    tpu.vector_store %arg7[%c0_130, %c1536], %340 {strides = array<i32>} : memref<8x1920xbf16, #tpu.memory_space<vmem>>, vector<8x128xbf16>,
    %342 = vector.extract_strided_slice %203 {offsets = [0, 768], sizes = [8, 128], strides = [1, 1]} : vector<8x1024xf32> to vector<8x128xf32>
    %cst_131 = arith.constant dense<0.000000e+00> : vector<8xf32>
    %343 = vector.multi_reduction <add>, %342, %cst_131 [1] : vector<8x128xf32> to vector<8xf32>
    %344 = vector.shape_cast %343 : vector<8xf32> to vector<8x1xf32>
    %cst_132 = arith.constant 7.812500e-03 : f32
    %345 = vector.broadcast %cst_132 : f32 to vector<8x1xf32>
    %346 = arith.mulf %344, %345 : vector<8x1xf32>
    %347 = vector.broadcast %346 : vector<8x1xf32> to vector<8x128xf32>
    %348 = arith.subf %342, %347 : vector<8x128xf32>
    %349 = arith.mulf %348, %348 : vector<8x128xf32>
    %cst_133 = arith.constant dense<0.000000e+00> : vector<8xf32>
    %350 = vector.multi_reduction <add>, %349, %cst_133 [1] : vector<8x128xf32> to vector<8xf32>
    %351 = vector.shape_cast %350 : vector<8xf32> to vector<8x1xf32>
    %cst_134 = arith.constant 7.812500e-03 : f32
    %352 = vector.broadcast %cst_134 : f32 to vector<8x1xf32>
    %353 = arith.mulf %351, %352 : vector<8x1xf32>
    %cst_135 = arith.constant 9.99999974E-6 : f32
    %354 = vector.broadcast %cst_135 : f32 to vector<8x1xf32>
    %355 = arith.addf %353, %354 : vector<8x1xf32>
    %356 = math.rsqrt %355 : vector<8x1xf32>
    %357 = vector.broadcast %356 : vector<8x1xf32> to vector<8x128xf32>
    %358 = arith.mulf %348, %357 : vector<8x128xf32>
    %359 = vector.broadcast %0 : vector<1x128xf32> to vector<8x128xf32>
    %360 = arith.mulf %358, %359 : vector<8x128xf32>
    %361 = vector.broadcast %1 : vector<1x128xf32> to vector<8x128xf32>
    %362 = arith.addf %360, %361 : vector<8x128xf32>
    %363 = arith.truncf %362 : vector<8x128xf32> to vector<8x128xbf16>
    %c0_136 = arith.constant 0 : index
    %c1664 = arith.constant 1664 : index
    %364 = vector.load %arg7[%c0_136, %c1664] : memref<8x1920xbf16, #tpu.memory_space<vmem>>, vector<8x128xbf16>
    tpu.vector_store %arg7[%c0_136, %c1664], %363 {strides = array<i32>} : memref<8x1920xbf16, #tpu.memory_space<vmem>>, vector<8x128xbf16>,
    %365 = vector.extract_strided_slice %203 {offsets = [0, 896], sizes = [8, 128], strides = [1, 1]} : vector<8x1024xf32> to vector<8x128xf32>
    %cst_137 = arith.constant dense<0.000000e+00> : vector<8xf32>
    %366 = vector.multi_reduction <add>, %365, %cst_137 [1] : vector<8x128xf32> to vector<8xf32>
    %367 = vector.shape_cast %366 : vector<8xf32> to vector<8x1xf32>
    %cst_138 = arith.constant 7.812500e-03 : f32
    %368 = vector.broadcast %cst_138 : f32 to vector<8x1xf32>
    %369 = arith.mulf %367, %368 : vector<8x1xf32>
    %370 = vector.broadcast %369 : vector<8x1xf32> to vector<8x128xf32>
    %371 = arith.subf %365, %370 : vector<8x128xf32>
    %372 = arith.mulf %371, %371 : vector<8x128xf32>
    %cst_139 = arith.constant dense<0.000000e+00> : vector<8xf32>
    %373 = vector.multi_reduction <add>, %372, %cst_139 [1] : vector<8x128xf32> to vector<8xf32>
    %374 = vector.shape_cast %373 : vector<8xf32> to vector<8x1xf32>
    %cst_140 = arith.constant 7.812500e-03 : f32
    %375 = vector.broadcast %cst_140 : f32 to vector<8x1xf32>
    %376 = arith.mulf %374, %375 : vector<8x1xf32>
    %cst_141 = arith.constant 9.99999974E-6 : f32
    %377 = vector.broadcast %cst_141 : f32 to vector<8x1xf32>
    %378 = arith.addf %376, %377 : vector<8x1xf32>
    %379 = math.rsqrt %378 : vector<8x1xf32>
    %380 = vector.broadcast %379 : vector<8x1xf32> to vector<8x128xf32>
    %381 = arith.mulf %371, %380 : vector<8x128xf32>
    %382 = vector.broadcast %0 : vector<1x128xf32> to vector<8x128xf32>
    %383 = arith.mulf %381, %382 : vector<8x128xf32>
    %384 = vector.broadcast %1 : vector<1x128xf32> to vector<8x128xf32>
    %385 = arith.addf %383, %384 : vector<8x128xf32>
    %386 = arith.truncf %385 : vector<8x128xf32> to vector<8x128xbf16>
    %c0_142 = arith.constant 0 : index
    %c1792 = arith.constant 1792 : index
    %387 = vector.load %arg7[%c0_142, %c1792] : memref<8x1920xbf16, #tpu.memory_space<vmem>>, vector<8x128xbf16>
    tpu.vector_store %arg7[%c0_142, %c1792], %386 {strides = array<i32>} : memref<8x1920xbf16, #tpu.memory_space<vmem>>, vector<8x128xbf16>,
    return
  }
  func.func @transform_0(%arg0: i32) -> (i32, i32) {
    %c0_i32 = arith.constant 0 : i32
    %c0_i32_0 = arith.constant 0 : i32
    return %arg0, %c0_i32 : i32, i32
  }
  func.func @transform_1(%arg0: i32) -> (i32, i32) {
    %c0_i32 = arith.constant 0 : i32
    %c0_i32_0 = arith.constant 0 : i32
    %c0_i32_1 = arith.constant 0 : i32
    return %c0_i32, %c0_i32_0 : i32, i32
  }
  func.func @transform_2(%arg0: i32) -> (i32, i32) {
    %c0_i32 = arith.constant 0 : i32
    %c0_i32_0 = arith.constant 0 : i32
    %c0_i32_1 = arith.constant 0 : i32
    return %c0_i32, %c0_i32_0 : i32, i32
  }
  func.func @transform_3(%arg0: i32) -> (i32, i32) {
    %c0_i32 = arith.constant 0 : i32
    %c0_i32_0 = arith.constant 0 : i32
    %c0_i32_1 = arith.constant 0 : i32
    return %c0_i32, %c0_i32_0 : i32, i32
  }
  func.func @transform_4(%arg0: i32) -> (i32, i32) {
    %c0_i32 = arith.constant 0 : i32
    %c0_i32_0 = arith.constant 0 : i32
    %c0_i32_1 = arith.constant 0 : i32
    return %c0_i32, %c0_i32_0 : i32, i32
  }
  func.func @transform_5(%arg0: i32) -> (i32, i32) {
    %c0_i32 = arith.constant 0 : i32
    %c0_i32_0 = arith.constant 0 : i32
    %c0_i32_1 = arith.constant 0 : i32
    return %c0_i32, %c0_i32_0 : i32, i32
  }
  func.func @transform_6(%arg0: i32) -> (i32, i32) {
    %c0_i32 = arith.constant 0 : i32
    %c0_i32_0 = arith.constant 0 : i32
    return %arg0, %c0_i32 : i32, i32
  }
}

</mosaic_0001>

<llo_original>
// kernel: tpu_custom_call.1
$region0: #{tpu_custom_call.1}
  #allocation0 [shape = 'u32[]', space=smem, size = 0x4, offset = 0x4, fixed_abs, tag = 'smem constant byte address 0x4 - core index']
  #allocation1 [shape = 'u32[144,128]{1,0:T(1,128)}', space=vmem, size = 0x12000, scoped, tag = 'internal scratch']
  %s0 = inlined_call_operand.hbm [shape: bf16[16,160], index: 0, kind: input, shape index: {}]
  %s1 = inlined_call_operand.hbm [shape: bf16[128,128], index: 1, kind: input, shape index: {}]
  %s2 = inlined_call_operand.hbm [shape: bf16[32,1024], index: 2, kind: input, shape index: {}]
  %s3 = inlined_call_operand.hbm [shape: f32[1,1920], index: 3, kind: input, shape index: {}]
  %s4 = inlined_call_operand.vmem [shape: f32[1,128], index: 4, kind: input, shape index: {}]
  %s5 = inlined_call_operand.vmem [shape: f32[1,128], index: 5, kind: input, shape index: {}]
  %s6 = inlined_call_operand.hbm [shape: bf16[16,1920], index: 6, kind: output, shape index: {}]
  %s7 = sld [smem:[#allocation0]]
  $region73: #{tpu_custom_call.1} parent=0
    _
  %s9 = ssub.s32 1, %s7
  %s10 = scalar_select 0, %s9, %s7
  $region1: #{tpu_custom_call.1} parent=0
    #allocation2 [shape = 'u8[8192]{0}', space=vmem, size = 0x2000, scoped, tag = 'input window, operand 0']
    #allocation3 [shape = 's32[2]{0}', space=sflag, size = 0x8, scoped, tag = 'scoped memory for tpu_custom_call.1']
    #allocation4 [shape = 's32[2]{0}', space=sflag, size = 0x8, scoped, tag = 'scoped memory for tpu_custom_call.1']
    #allocation5 [shape = 'u8[32768]{0}', space=vmem, size = 0x8000, scoped, tag = 'input window, operand 1, single buffered']
    #allocation6 [shape = 's32[1]{0}', space=sflag, size = 0x4, scoped, tag = 'scoped memory for tpu_custom_call.1']
    #allocation7 [shape = 'u8[65536]{0}', space=vmem, size = 0x10000, scoped, tag = 'input window, operand 2, single buffered']
    #allocation8 [shape = 'u8[7680]{0}', space=vmem, size = 0x2000, scoped, tag = 'input window, operand 3, single buffered']
    #allocation9 [shape = 's32[1]{0}', space=sflag, size = 0x4, scoped, tag = 'scoped memory for tpu_custom_call.1']
    #allocation10 [shape = 'u8[61440]{0}', space=vmem, size = 0xf000, scoped, tag = 'output window, operand 0']
    %11 = vsyncpa [#allocation3], 0
    %s12 = scalar_lea.sflag [#allocation3], 1
    %13 = vsyncpa %s12, 0
    %14 = vsyncpa [#allocation6], 0
    %15 = vsyncpa [#allocation9], 0
    %16 = vsyncpa [#allocation4], 0
    %s17 = scalar_lea.sflag [#allocation4], 1
    %18 = vsyncpa %s17, 0
    loop: start=0, step=1, limit=4
    $region2: #{tpu_custom_call.1} parent=1 // loop_pre_header
      _
    $region3: #{tpu_custom_call.1} parent=1 // loop_header
      %s20 = sphi 0, %s24
      %p21 = scmp.ge.s32.totalorder %s20, 4
      %s30 = sphi 0, %s32
      %s33 = sphi 0, %s30
      %s34 = sphi 0, %s33
      %s50 = sphi 0, %s34
      %s54 = sphi 0, %s54
      %s56 = sphi 0, %s54
      %s57 = sphi 0, %s56
      %s71 = sphi 0, %s57
      %s75 = sphi 0, %s75
      %s77 = sphi 0, %s75
      %s78 = sphi 0, %s77
      %s92 = sphi 0, %s78
      %s96 = sphi 0, %s96
      %s98 = sphi 0, %s96
      %s99 = sphi 0, %s98
      %s113 = sphi 0, %s99
      %s117 = sphi 0, %s117
      %s119 = sphi 0, %s117
      %s120 = sphi 0, %s119
      %s134 = sphi 0, %s120
      %s138 = sphi 0, %s138
      %s140 = sphi 0, %s138
      %s141 = sphi 0, %s140
      %s155 = sphi 0, %s141
      %s161 = sphi 0, %s163
      %s164 = sphi 0, %s161
      %s165 = sphi 0, %s164
      %s181 = sphi 0, %s165
    $region4: #{tpu_custom_call.1} parent=1 // loop_header_branch
      %23 = sbr.rel (%p21) target = $region8
    $region5: #{tpu_custom_call.1} parent=1 // loop_body
      %s25 = ssub.s32 %s20, 1
      %s26 = ssub.s32 %s20, 2
      %s27 = sadd.s32 %s20, 1
      %s28 = ssub.s32 %s20, %s27
      %p29 = scmp.eq.s32.totalorder %s28, 0
      %s31 = sadd.s32 %s30, 1
      %s32 = scalar_select %p29, %s30, %s31
      %p35 = pneg %p29
      %p36 = scmp.eq.s32.totalorder %s20, 1
      %p37 = por %p35, %p36
      %p38 = scmp.ne.s32.totalorder %s30, %s33
      %p39 = scmp.eq.s32.totalorder %s20, 0
      %p40 = por %p38, %p39
      %p41 = scmp.ne.s32.totalorder %s30, %s33
      %p42 = scmp.eq.s32.totalorder %s25, 1
      %p43 = por %p41, %p42
      %p44 = scmp.ne.s32.totalorder %s33, %s34
      %p45 = scmp.eq.s32.totalorder %s25, 0
      %p46 = por %p44, %p45
      %p47 = scmp.ne.s32.totalorder %s33, %s34
      %p48 = scmp.eq.s32.totalorder %s26, 1
      %p49 = por %p47, %p48
      %p51 = scmp.ne.s32.totalorder %s34, %s50
      %p52 = scmp.eq.s32.totalorder %s26, 0
      %p53 = por %p51, %p52
      %s55 = sadd.s32 %s54, 1
      %p58 = scmp.eq.s32.totalorder %s20, 1
      %p59 = scmp.ne.s32.totalorder %s54, %s56
      %p60 = scmp.eq.s32.totalorder %s20, 0
      %p61 = por %p59, %p60
      %p62 = scmp.ne.s32.totalorder %s54, %s56
      %p63 = scmp.eq.s32.totalorder %s25, 1
      %p64 = por %p62, %p63
      %p65 = scmp.ne.s32.totalorder %s56, %s57
      %p66 = scmp.eq.s32.totalorder %s25, 0
      %p67 = por %p65, %p66
      %p68 = scmp.ne.s32.totalorder %s56, %s57
      %p69 = scmp.eq.s32.totalorder %s26, 1
      %p70 = por %p68, %p69
      %p72 = scmp.ne.s32.totalorder %s57, %s71
      %p73 = scmp.eq.s32.totalorder %s26, 0
      %p74 = por %p72, %p73
      %s76 = sadd.s32 %s75, 1
      %p79 = scmp.eq.s32.totalorder %s20, 1
      %p80 = scmp.ne.s32.totalorder %s75, %s77
      %p81 = scmp.eq.s32.totalorder %s20, 0
      %p82 = por %p80, %p81
      %p83 = scmp.ne.s32.totalorder %s75, %s77
      %p84 = scmp.eq.s32.totalorder %s25, 1
      %p85 = por %p83, %p84
      %p86 = scmp.ne.s32.totalorder %s77, %s78
      %p87 = scmp.eq.s32.totalorder %s25, 0
      %p88 = por %p86, %p87
      %p89 = scmp.ne.s32.totalorder %s77, %s78
      %p90 = scmp.eq.s32.totalorder %s26, 1
      %p91 = por %p89, %p90
      %p93 = scmp.ne.s32.totalorder %s78, %s92
      %p94 = scmp.eq.s32.totalorder %s26, 0
      %p95 = por %p93, %p94
      %s97 = sadd.s32 %s96, 1
      %p100 = scmp.eq.s32.totalorder %s20, 1
      %p101 = scmp.ne.s32.totalorder %s96, %s98
      %p102 = scmp.eq.s32.totalorder %s20, 0
      %p103 = por %p101, %p102
      %p104 = scmp.ne.s32.totalorder %s96, %s98
      %p105 = scmp.eq.s32.totalorder %s25, 1
      %p106 = por %p104, %p105
      %p107 = scmp.ne.s32.totalorder %s98, %s99
      %p108 = scmp.eq.s32.totalorder %s25, 0
      %p109 = por %p107, %p108
      %p110 = scmp.ne.s32.totalorder %s98, %s99
      %p111 = scmp.eq.s32.totalorder %s26, 1
      %p112 = por %p110, %p111
      %p114 = scmp.ne.s32.totalorder %s99, %s113
      %p115 = scmp.eq.s32.totalorder %s26, 0
      %p116 = por %p114, %p115
      %s118 = sadd.s32 %s117, 1
      %p121 = scmp.eq.s32.totalorder %s20, 1
      %p122 = scmp.ne.s32.totalorder %s117, %s119
      %p123 = scmp.eq.s32.totalorder %s20, 0
      %p124 = por %p122, %p123
      %p125 = scmp.ne.s32.totalorder %s117, %s119
      %p126 = scmp.eq.s32.totalorder %s25, 1
      %p127 = por %p125, %p126
      %p128 = scmp.ne.s32.totalorder %s119, %s120
      %p129 = scmp.eq.s32.totalorder %s25, 0
      %p130 = por %p128, %p129
      %p131 = scmp.ne.s32.totalorder %s119, %s120
      %p132 = scmp.eq.s32.totalorder %s26, 1
      %p133 = por %p131, %p132
      %p135 = scmp.ne.s32.totalorder %s120, %s134
      %p136 = scmp.eq.s32.totalorder %s26, 0
      %p137 = por %p135, %p136
      %s139 = sadd.s32 %s138, 1
      %p142 = scmp.eq.s32.totalorder %s20, 1
      %p143 = scmp.ne.s32.totalorder %s138, %s140
      %p144 = scmp.eq.s32.totalorder %s20, 0
      %p145 = por %p143, %p144
      %p146 = scmp.ne.s32.totalorder %s138, %s140
      %p147 = scmp.eq.s32.totalorder %s25, 1
      %p148 = por %p146, %p147
      %p149 = scmp.ne.s32.totalorder %s140, %s141
      %p150 = scmp.eq.s32.totalorder %s25, 0
      %p151 = por %p149, %p150
      %p152 = scmp.ne.s32.totalorder %s140, %s141
      %p153 = scmp.eq.s32.totalorder %s26, 1
      %p154 = por %p152, %p153
      %p156 = scmp.ne.s32.totalorder %s141, %s155
      %p157 = scmp.eq.s32.totalorder %s26, 0
      %p158 = por %p156, %p157
      %s159 = ssub.s32 %s20, %s27
      %p160 = scmp.eq.s32.totalorder %s159, 0
      %s162 = sadd.s32 %s161, 1
      %s163 = scalar_select %p160, %s161, %s162
      %p166 = pneg %p160
      %p167 = scmp.eq.s32.totalorder %s20, 1
      %p168 = por %p166, %p167
      %p169 = scmp.ne.s32.totalorder %s161, %s164
      %p170 = scmp.eq.s32.totalorder %s20, 0
      %p171 = por %p169, %p170
      %p172 = scmp.ne.s32.totalorder %s161, %s164
      %p173 = scmp.eq.s32.totalorder %s25, 1
      %p174 = por %p172, %p173
      %p175 = scmp.ne.s32.totalorder %s164, %s165
      %p176 = scmp.eq.s32.totalorder %s25, 0
      %p177 = por %p175, %p176
      %p178 = scmp.ne.s32.totalorder %s164, %s165
      %p179 = scmp.eq.s32.totalorder %s26, 1
      %p180 = por %p178, %p179
      %p182 = scmp.ne.s32.totalorder %s165, %s181
      %p183 = scmp.eq.s32.totalorder %s26, 0
      %p184 = por %p182, %p183
      %p185 = scmp.le.s32.totalorder 1, %s20
      %p186 = scmp.lt.s32.totalorder %s20, 3
      %p187 = pnand %p185, %p186
      %p188 = pneg %p187
      // Predicated region
      $region9: #{tpu_custom_call.1} parent=5 // pred_check
        _
      $region10: #{tpu_custom_call.1} parent=5 // pred_check_branch
        %190 = sbr.rel (%p187) target = $region12
      $region11: #{tpu_custom_call.1} parent=5 // pred_region
        %s191 = ssub.s32 %s20, 1
        // Predicated region
        $region13: #{tpu_custom_call.1} parent=11 // pred_check
          %p192 = pneg %p67
        $region14: #{tpu_custom_call.1} parent=11 // pred_check_branch
          %194 = sbr.rel (%p192) target = $region16
        $region15: #{tpu_custom_call.1} parent=11 // pred_region
          %s196 = ssub.s32 1024, 1024
          %197 = vsyncadd [#allocation6], %s196
          %s198 = sshll.u32 [#allocation5], 4
          %s199 = int_to_ptr.vmem [resolvable:$true] %s198
          %204 = dma.hbm_to_vmem [thread:$0]  %s1, 1024, %s199, [#allocation6], 64, 64, 4
        $region16: #{tpu_custom_call.1} parent=11 // pred_fallthru
          _
        // Predicated region
        $region17: #{tpu_custom_call.1} parent=11 // pred_check
          %p205 = pneg %p88
        $region18: #{tpu_custom_call.1} parent=11 // pred_check_branch
          %207 = sbr.rel (%p205) target = $region20
        $region19: #{tpu_custom_call.1} parent=11 // pred_region
          %s209 = ssub.s32 2048, 2048
          %210 = vsyncadd [#allocation6], %s209
          %s211 = sshll.u32 [#allocation7], 4
          %s212 = int_to_ptr.vmem [resolvable:$true] %s211
          %217 = dma.hbm_to_vmem [thread:$0]  %s2, 2048, %s212, [#allocation6], 512, 512, 32
        $region20: #{tpu_custom_call.1} parent=11 // pred_fallthru
          _
        // Predicated region
        $region21: #{tpu_custom_call.1} parent=11 // pred_check
          %p218 = pneg %p109
        $region22: #{tpu_custom_call.1} parent=11 // pred_check_branch
          %220 = sbr.rel (%p218) target = $region24
        $region23: #{tpu_custom_call.1} parent=11 // pred_region
          %s222 = ssub.s32 240, 240
          %223 = vsyncadd [#allocation9], %s222
          %s225 = sshll.u32 [#allocation8], 4
          %s226 = int_to_ptr.vmem [resolvable:$true] %s225
          %228 = dma.hbm_to_vmem [thread:$0]  %s3, 240, %s226, [#allocation9]
        $region24: #{tpu_custom_call.1} parent=11 // pred_fallthru
          _
        // Predicated region
        $region25: #{tpu_custom_call.1} parent=11 // pred_check
          %p229 = pneg %p130
        $region26: #{tpu_custom_call.1} parent=11 // pred_check_branch
          %231 = sbr.rel (%p229) target = $region28
        $region27: #{tpu_custom_call.1} parent=11 // pred_region
          _
        $region28: #{tpu_custom_call.1} parent=11 // pred_fallthru
          _
        // Predicated region
        $region29: #{tpu_custom_call.1} parent=11 // pred_check
          %p232 = pneg %p151
        $region30: #{tpu_custom_call.1} parent=11 // pred_check_branch
          %234 = sbr.rel (%p232) target = $region32
        $region31: #{tpu_custom_call.1} parent=11 // pred_region
          _
        $region32: #{tpu_custom_call.1} parent=11 // pred_fallthru
          _
      $region12: #{tpu_custom_call.1} parent=5 // pred_fallthru
        _
      %p235 = scmp.lt.s32.totalorder %s20, 2
      // Predicated region
      $region33: #{tpu_custom_call.1} parent=5 // pred_check
        %p236 = pneg %p235
      $region34: #{tpu_custom_call.1} parent=5 // pred_check_branch
        %238 = sbr.rel (%p236) target = $region36
      $region35: #{tpu_custom_call.1} parent=5 // pred_region
        // Predicated region
        $region37: #{tpu_custom_call.1} parent=35 // pred_check
          %p239 = pneg %p40
        $region38: #{tpu_custom_call.1} parent=35 // pred_check_branch
          %241 = sbr.rel (%p239) target = $region40
        $region39: #{tpu_custom_call.1} parent=35 // pred_region
          %s242 = sand.u32 %s30, 1
          %s243 = scalar_lea.sflag [#allocation3], %s242
          %s244 = sand.u32 %s30, 1
          %s245 = smul.addr %s244, 8
          %s246 = scalar_lea.vmem [#allocation2], %s245
          %s248 = ssub.s32 128, 128
          %249 = vsyncadd %s243, %s248
          %s250 = smul.addr %s20, 2
          %s251 = smul.addr %s250, 64
          %s252 = scalar_lea.hbm %s0, %s251
          %s254 = sshll.u32 %s246, 4
          %s255 = int_to_ptr.vmem [resolvable:$true] %s254
          %257 = dma.hbm_to_vmem [thread:$0]  %s252, 128, %s255, %s243
        $region40: #{tpu_custom_call.1} parent=35 // pred_fallthru
          _
      $region36: #{tpu_custom_call.1} parent=5 // pred_fallthru
        _
      %p258 = scmp.le.s32.totalorder 1, %s20
      %p259 = scmp.lt.s32.totalorder %s20, 3
      %p260 = pnand %p258, %p259
      %p261 = pneg %p260
      // Predicated region
      $region41: #{tpu_custom_call.1} parent=5 // pred_check
        _
      $region42: #{tpu_custom_call.1} parent=5 // pred_check_branch
        %263 = sbr.rel (%p260) target = $region44
      $region43: #{tpu_custom_call.1} parent=5 // pred_region
        %s264 = ssub.s32 %s20, 1
        %s265 = sand.u32 %s33, 1
        %s266 = scalar_lea.sflag [#allocation3], %s265
        %s267 = sand.u32 %s33, 1
        %s268 = smul.addr %s267, 8
        %s269 = scalar_lea.vmem [#allocation2], %s268
        // Predicated region
        $region45: #{tpu_custom_call.1} parent=43 // pred_check
          %p270 = pneg %p46
        $region46: #{tpu_custom_call.1} parent=43 // pred_check_branch
          %272 = sbr.rel (%p270) target = $region48
        $region47: #{tpu_custom_call.1} parent=43 // pred_region
          %273 = dma.done %s266, 128
        $region48: #{tpu_custom_call.1} parent=43 // pred_fallthru
          _
        // Predicated region
        $region49: #{tpu_custom_call.1} parent=43 // pred_check
          %p274 = pneg %p67
        $region50: #{tpu_custom_call.1} parent=43 // pred_check_branch
          %276 = sbr.rel (%p274) target = $region52
        $region51: #{tpu_custom_call.1} parent=43 // pred_region
          %277 = dma.done [#allocation6], 1024
        $region52: #{tpu_custom_call.1} parent=43 // pred_fallthru
          _
        // Predicated region
        $region53: #{tpu_custom_call.1} parent=43 // pred_check
          %p278 = pneg %p88
        $region54: #{tpu_custom_call.1} parent=43 // pred_check_branch
          %280 = sbr.rel (%p278) target = $region56
        $region55: #{tpu_custom_call.1} parent=43 // pred_region
          %281 = dma.done [#allocation6], 2048
        $region56: #{tpu_custom_call.1} parent=43 // pred_fallthru
          _
        // Predicated region
        $region57: #{tpu_custom_call.1} parent=43 // pred_check
          %p282 = pneg %p109
        $region58: #{tpu_custom_call.1} parent=43 // pred_check_branch
          %284 = sbr.rel (%p282) target = $region60
        $region59: #{tpu_custom_call.1} parent=43 // pred_region
          %285 = dma.done [#allocation9], 240
        $region60: #{tpu_custom_call.1} parent=43 // pred_fallthru
          _
        %s286 = sand.u32 %s33, 1
        %s287 = scalar_lea.sflag [#allocation3], %s286
        %s288 = sand.u32 %s33, 1
        %s289 = smul.addr %s288, 8
        %s290 = scalar_lea.vmem [#allocation2], %s289
        %p291 = pneg %p46
        %p292 = pneg %p43
        %p293 = pneg %p67
        %p294 = pneg %p64
        %p295 = pneg %p88
        %p296 = pneg %p85
        %p297 = pneg %p109
        %p298 = pneg %p106
        %p299 = pneg %p130
        %p300 = pneg %p127
        %p301 = pneg %p151
        %p302 = pneg %p148
        %p303 = pneg %p177
        %p304 = pneg %p174
        %s305 = sand.u32 %s164, 1
        %s306 = scalar_lea.sflag [#allocation4], %s305
        %s307 = sand.u32 %s164, 1
        %s308 = smul.addr %s307, 60
        %s309 = scalar_lea.vmem [#allocation10], %s308
        %v311 = vld [vmem:[%s4] sm:$0x1]
        %v312 = vld [vmem:[%s5] sm:$0x1]
        %v313 = vld [vmem:[%s269] sm:$0xf]
        %v314 = vld [vmem:[#allocation5] sm:$0xf]
        %v315 = vld [vmem:[#allocation5 + $0x4] sm:$0xf]
        %v316 = vld [vmem:[#allocation5 + $0x8] sm:$0xf]
        %v317 = vld [vmem:[#allocation8] sm:$0x1]
        %v319 = vlaneseq
        %v320 = vshrl.u32 %v319, 7
        %v321 = vsub.s32 0, %v320
        %v322 = vrot.slane %v317, %v321
        %v327 = vunpack.c.l.b16 %v314
        %v328 = vunpack.c.l.b16 %v315
        %v329 = vunpack.c.l.b16 %v316
        %v330 = vpack.c.b16 %v328, %v327
        %v331 = vpack.c.b16 %v329, %v329
        %vm333 = vcmask 195584
        %v335 = vsel %vm333, %v313, 0
        %vm337 = vcmask 1043456
        %v339 = vsel %vm337, %v331, 0
        %341 = vmatprep.subr.bf16.mxu0 0
        %342 = vmatpush1.bf16.msra.mxu0 0
        %343 = vmatprep.subr.bf16.mxu0 0
        %344 = vmatpush1.bf16.msra.mxu0 0
        %345 = vmatprep.subr.bf16.mxu0 0
        %346 = vmatpush1.bf16.msra.mxu0 0
        %347 = vmatprep.subr.bf16.mxu0 0
        %348 = vmatpush1.bf16.msra.mxu0 0
        %349 = vmatprep.subr.bf16.mxu0 0
        %350 = vmatpush1.bf16.msra.mxu0 0
        %351 = vmatprep.subr.bf16.mxu0 0
        %352 = vmatpush1.bf16.msra.mxu0 0
        %353 = vmatprep.subr.bf16.mxu0 0
        %354 = vmatpush1.bf16.msra.mxu0 %v339
        %355 = vmatprep.subr.bf16.mxu0 0
        %356 = vmatpush1.bf16.msra.mxu0 %v330
        %357 = vmatprep.subr.bf16.mxu0 0
        %358 = vmatpush2.bf16.msra.mxu0 0
        %359 = vmatprep.subr.bf16.mxu0 0
        %360 = vmatpush2.bf16.msra.mxu0 0
        %361 = vmatprep.subr.bf16.mxu0 0
        %362 = vmatpush2.bf16.msra.mxu0 0
        %363 = vmatprep.subr.bf16.mxu0 0
        %364 = vmatpush2.bf16.msra.mxu0 0
        %365 = vmatprep.subr.bf16.mxu0 0
        %366 = vmatpush2.bf16.msra.mxu0 0
        %367 = vmatprep.subr.bf16.mxu0 0
        %368 = vmatpush2.bf16.msra.mxu0 0
        %369 = vmatprep.subr.bf16.mxu0 0
        %370 = vmatpush2.bf16.msra.mxu0 0
        %371 = vmatprep.subr.bf16.mxu0 0
        %372 = vmatpush2.bf16.msra.mxu0 0
        %373 = vmatprep.mubr.bf16.mxu0 0
        %374 = vmatmul.mubr.bf16.gmra.mxu0 %v335
        %v375 = vpop.f32.mrf.mxu0
        %v376 = vadd.f32 %v322, %v375
        %v377 = vpop.f32.mrf.mxu0
        %v378 = vpop.f32.mrf.mxu0
        %v379 = vpop.f32.mrf.mxu0
        %380 = vdwg.mxu0
        %381 = vadd.xlane.f32.xlu0 %v376
        %v382 = vpop.xlane.xlu0 %381
        %v383 = vmul.f32 %v382, 0.0078125
        %v384 = vsub.f32 %v376, %v383
        %v385 = vmul.f32 %v384, %v384
        %386 = vadd.xlane.f32.xlu0 %v385
        %v387 = vpop.xlane.xlu0 %386
        %v388 = vmul.f32 %v387, 0.0078125
        %v389 = vadd.f32 %v388, 1e-05
        %v390 = vrsqrt.pop %v389
        %v391 = vmul.f32 %v384, %v390
        %v393 = vlaneseq
        %v394 = vshrl.u32 %v393, 7
        %v395 = vsub.s32 0, %v394
        %v396 = vrot.slane %v311, %v395
        %v398 = vmul.f32 %v391, %v396
        %v400 = vlaneseq
        %v401 = vshrl.u32 %v400, 7
        %v402 = vsub.s32 0, %v401
        %v403 = vrot.slane %v312, %v402
        %v405 = vadd.f32 %v398, %v403
        %v406 = vpack.c.bf16 %v405, %v405
        %407 = vst [vmem:[%s309] sm:$0xf] %v406
        %v408 = vld [vmem:[%s269] sm:$0xf]
        %v409 = vld [vmem:[#allocation5 + $0xc] sm:$0xf]
        %v410 = vld [vmem:[#allocation5 + $0x10] sm:$0xf]
        %v411 = vld [vmem:[#allocation5 + $0x14] sm:$0xf]
        %v412 = vld [vmem:[#allocation5 + $0x18] sm:$0xf]
        %v413 = vld [vmem:[#allocation5 + $0x1c] sm:$0xf]
        %v414 = vld [vmem:[#allocation8 + $0x1] sm:$0x1]
        %v416 = vlaneseq
        %v417 = vshrl.u32 %v416, 7
        %v418 = vsub.s32 0, %v417
        %v419 = vrot.slane %v414, %v418
        %v422 = vunpack.c.l.b16 %v408
        %v423 = vpack.c.b16 %v422, %v422
        %424 = vrot.lane.b32.xlu0 %v423, 104
        %v425 = vpop.permute.xlu0 %424
        %v431 = vunpack.c.l.b16 %v409
        %v432 = vunpack.c.l.b16 %v410
        %v433 = vunpack.c.l.b16 %v411
        %v434 = vunpack.c.l.b16 %v412
        %v435 = vunpack.c.l.b16 %v413
        %v436 = vpack.c.b16 %v432, %v431
        %v437 = vpack.c.b16 %v434, %v433
        %v438 = vpack.c.b16 %v435, %v435
        %vm441 = vcmask 326656
        %v443 = vsel %vm441, %v425, 0
        %v446 = vsel %vm337, %v438, 0
        %448 = vmatprep.subr.bf16.mxu0 0
        %449 = vmatpush1.bf16.msra.mxu0 0
        %450 = vmatprep.subr.bf16.mxu0 0
        %451 = vmatpush1.bf16.msra.mxu0 0
        %452 = vmatprep.subr.bf16.mxu0 0
        %453 = vmatpush1.bf16.msra.mxu0 0
        %454 = vmatprep.subr.bf16.mxu0 0
        %455 = vmatpush1.bf16.msra.mxu0 0
        %456 = vmatprep.subr.bf16.mxu0 0
        %457 = vmatpush1.bf16.msra.mxu0 0
        %458 = vmatprep.subr.bf16.mxu0 0
        %459 = vmatpush1.bf16.msra.mxu0 %v446
        %460 = vmatprep.subr.bf16.mxu0 0
        %461 = vmatpush1.bf16.msra.mxu0 %v437
        %462 = vmatprep.subr.bf16.mxu0 0
        %463 = vmatpush1.bf16.msra.mxu0 %v436
        %464 = vmatprep.subr.bf16.mxu0 0
        %465 = vmatpush2.bf16.msra.mxu0 0
        %466 = vmatprep.subr.bf16.mxu0 0
        %467 = vmatpush2.bf16.msra.mxu0 0
        %468 = vmatprep.subr.bf16.mxu0 0
        %469 = vmatpush2.bf16.msra.mxu0 0
        %470 = vmatprep.subr.bf16.mxu0 0
        %471 = vmatpush2.bf16.msra.mxu0 0
        %472 = vmatprep.subr.bf16.mxu0 0
        %473 = vmatpush2.bf16.msra.mxu0 0
        %474 = vmatprep.subr.bf16.mxu0 0
        %475 = vmatpush2.bf16.msra.mxu0 0
        %476 = vmatprep.subr.bf16.mxu0 0
        %477 = vmatpush2.bf16.msra.mxu0 0
        %478 = vmatprep.subr.bf16.mxu0 0
        %479 = vmatpush2.bf16.msra.mxu0 0
        %480 = vmatprep.mubr.bf16.mxu0 0
        %481 = vmatmul.mubr.bf16.gmra.mxu0 %v443
        %v482 = vpop.f32.mrf.mxu0
        %v483 = vadd.f32 %v419, %v482
        %v484 = vpop.f32.mrf.mxu0
        %v485 = vpop.f32.mrf.mxu0
        %v486 = vpop.f32.mrf.mxu0
        %487 = vdwg.mxu0
        %488 = vadd.xlane.f32.xlu0 %v483
        %v489 = vpop.xlane.xlu0 %488
        %v490 = vmul.f32 %v489, 0.0078125
        %v491 = vsub.f32 %v483, %v490
        %v492 = vmul.f32 %v491, %v491
        %493 = vadd.xlane.f32.xlu0 %v492
        %v494 = vpop.xlane.xlu0 %493
        %v495 = vmul.f32 %v494, 0.0078125
        %v496 = vadd.f32 %v495, 1e-05
        %v497 = vrsqrt.pop %v496
        %v498 = vmul.f32 %v491, %v497
        %v499 = vmul.f32 %v498, %v396
        %v500 = vadd.f32 %v499, %v403
        %v501 = vpack.c.bf16 %v500, %v500
        %502 = vst [vmem:[%s309 + $0x4] sm:$0xf] %v501
        %v503 = vld [vmem:[%s269] sm:$0xf]
        %v504 = vld [vmem:[#allocation5 + $0x20] sm:$0xf]
        %v505 = vld [vmem:[#allocation5 + $0x24] sm:$0xf]
        %v506 = vld [vmem:[#allocation5 + $0x28] sm:$0xf]
        %v507 = vld [vmem:[#allocation5 + $0x2c] sm:$0xf]
        %v508 = vld [vmem:[#allocation8 + $0x2] sm:$0x1]
        %v510 = vlaneseq
        %v511 = vshrl.u32 %v510, 7
        %v512 = vsub.s32 0, %v511
        %v513 = vrot.slane %v508, %v512
        %v516 = vunpack.c.l.b16 %v503
        %v517 = vpack.c.b16 %v516, %v516
        %518 = vrot.lane.b32.xlu0 %v517, 64
        %v519 = vpop.permute.xlu0 %518
        %v524 = vunpack.c.l.b16 %v504
        %v525 = vunpack.c.l.b16 %v505
        %v526 = vunpack.c.l.b16 %v506
        %v527 = vunpack.c.l.b16 %v507
        %v528 = vpack.c.b16 %v525, %v524
        %v529 = vpack.c.b16 %v527, %v526
        %vm532 = vcmask 261120
        %v534 = vsel %vm532, %v519, 0
        %536 = vmatprep.subr.bf16.mxu0 0
        %537 = vmatpush1.bf16.msra.mxu0 0
        %538 = vmatprep.subr.bf16.mxu0 0
        %539 = vmatpush1.bf16.msra.mxu0 0
        %540 = vmatprep.subr.bf16.mxu0 0
        %541 = vmatpush1.bf16.msra.mxu0 0
        %542 = vmatprep.subr.bf16.mxu0 0
        %543 = vmatpush1.bf16.msra.mxu0 0
        %544 = vmatprep.subr.bf16.mxu0 0
        %545 = vmatpush1.bf16.msra.mxu0 0
        %546 = vmatprep.subr.bf16.mxu0 0
        %547 = vmatpush1.bf16.msra.mxu0 0
        %548 = vmatprep.subr.bf16.mxu0 0
        %549 = vmatpush1.bf16.msra.mxu0 %v529
        %550 = vmatprep.subr.bf16.mxu0 0
        %551 = vmatpush1.bf16.msra.mxu0 %v528
        %552 = vmatprep.subr.bf16.mxu0 0
        %553 = vmatpush2.bf16.msra.mxu0 0
        %554 = vmatprep.subr.bf16.mxu0 0
        %555 = vmatpush2.bf16.msra.mxu0 0
        %556 = vmatprep.subr.bf16.mxu0 0
        %557 = vmatpush2.bf16.msra.mxu0 0
        %558 = vmatprep.subr.bf16.mxu0 0
        %559 = vmatpush2.bf16.msra.mxu0 0
        %560 = vmatprep.subr.bf16.mxu0 0
        %561 = vmatpush2.bf16.msra.mxu0 0
        %562 = vmatprep.subr.bf16.mxu0 0
        %563 = vmatpush2.bf16.msra.mxu0 0
        %564 = vmatprep.subr.bf16.mxu0 0
        %565 = vmatpush2.bf16.msra.mxu0 0
        %566 = vmatprep.subr.bf16.mxu0 0
        %567 = vmatpush2.bf16.msra.mxu0 0
        %568 = vmatprep.mubr.bf16.mxu0 0
        %569 = vmatmul.mubr.bf16.gmra.mxu0 %v534
        %v570 = vpop.f32.mrf.mxu0
        %v571 = vadd.f32 %v513, %v570
        %v572 = vpop.f32.mrf.mxu0
        %v573 = vpop.f32.mrf.mxu0
        %v574 = vpop.f32.mrf.mxu0
        %575 = vdwg.mxu0
        %576 = vadd.xlane.f32.xlu0 %v571
        %v577 = vpop.xlane.xlu0 %576
        %v578 = vmul.f32 %v577, 0.0078125
        %v579 = vsub.f32 %v571, %v578
        %v580 = vmul.f32 %v579, %v579
        %581 = vadd.xlane.f32.xlu0 %v580
        %v582 = vpop.xlane.xlu0 %581
        %v583 = vmul.f32 %v582, 0.0078125
        %v584 = vadd.f32 %v583, 1e-05
        %v585 = vrsqrt.pop %v584
        %v586 = vmul.f32 %v579, %v585
        %v587 = vmul.f32 %v586, %v396
        %v588 = vadd.f32 %v587, %v403
        %v589 = vpack.c.bf16 %v588, %v588
        %590 = vst [vmem:[%s309 + $0x8] sm:$0xf] %v589
        %v591 = vld [vmem:[%s269] sm:$0xf]
        %v592 = vld [vmem:[#allocation5 + $0x30] sm:$0xf]
        %v593 = vld [vmem:[#allocation8 + $0x3] sm:$0x1]
        %v595 = vlaneseq
        %v596 = vshrl.u32 %v595, 7
        %v597 = vsub.s32 0, %v596
        %v598 = vrot.slane %v593, %v597
        %v601 = vunpack.c.l.b16 %v591
        %v602 = vpack.c.b16 %v601, %v601
        %603 = vrot.lane.b32.xlu0 %v602, 32
        %v604 = vpop.permute.xlu0 %603
        %vm605 = vcmask 64512
        %v607 = vsel %vm605, %v604, 0
        %v610 = vsel %vm337, %v592, 0
        %612 = vmatprep.subr.bf16.mxu0 0
        %613 = vmatpush1.bf16.msra.mxu0 0
        %614 = vmatprep.subr.bf16.mxu0 0
        %615 = vmatpush1.bf16.msra.mxu0 0
        %616 = vmatprep.subr.bf16.mxu0 0
        %617 = vmatpush1.bf16.msra.mxu0 0
        %618 = vmatprep.subr.bf16.mxu0 0
        %619 = vmatpush1.bf16.msra.mxu0 0
        %620 = vmatprep.subr.bf16.mxu0 0
        %621 = vmatpush1.bf16.msra.mxu0 0
        %622 = vmatprep.subr.bf16.mxu0 0
        %623 = vmatpush1.bf16.msra.mxu0 0
        %624 = vmatprep.subr.bf16.mxu0 0
        %625 = vmatpush1.bf16.msra.mxu0 0
        %626 = vmatprep.subr.bf16.mxu0 0
        %627 = vmatpush1.bf16.msra.mxu0 %v610
        %628 = vmatprep.subr.bf16.mxu0 0
        %629 = vmatpush2.bf16.msra.mxu0 0
        %630 = vmatprep.subr.bf16.mxu0 0
        %631 = vmatpush2.bf16.msra.mxu0 0
        %632 = vmatprep.subr.bf16.mxu0 0
        %633 = vmatpush2.bf16.msra.mxu0 0
        %634 = vmatprep.subr.bf16.mxu0 0
        %635 = vmatpush2.bf16.msra.mxu0 0
        %636 = vmatprep.subr.bf16.mxu0 0
        %637 = vmatpush2.bf16.msra.mxu0 0
        %638 = vmatprep.subr.bf16.mxu0 0
        %639 = vmatpush2.bf16.msra.mxu0 0
        %640 = vmatprep.subr.bf16.mxu0 0
        %641 = vmatpush2.bf16.msra.mxu0 0
        %642 = vmatprep.subr.bf16.mxu0 0
        %643 = vmatpush2.bf16.msra.mxu0 0
        %644 = vmatprep.mubr.bf16.mxu0 0
        %645 = vmatmul.mubr.bf16.gmra.mxu0 %v607
        %v646 = vpop.f32.mrf.mxu0
        %v647 = vadd.f32 %v598, %v646
        %v648 = vpop.f32.mrf.mxu0
        %v649 = vpop.f32.mrf.mxu0
        %v650 = vpop.f32.mrf.mxu0
        %651 = vdwg.mxu0
        %652 = vadd.xlane.f32.xlu0 %v647
        %v653 = vpop.xlane.xlu0 %652
        %v654 = vmul.f32 %v653, 0.0078125
        %v655 = vsub.f32 %v647, %v654
        %v656 = vmul.f32 %v655, %v655
        %657 = vadd.xlane.f32.xlu0 %v656
        %v658 = vpop.xlane.xlu0 %657
        %v659 = vmul.f32 %v658, 0.0078125
        %v660 = vadd.f32 %v659, 1e-05
        %v661 = vrsqrt.pop %v660
        %v662 = vmul.f32 %v655, %v661
        %v663 = vmul.f32 %v662, %v396
        %v664 = vadd.f32 %v663, %v403
        %v665 = vpack.c.bf16 %v664, %v664
        %666 = vst [vmem:[%s309 + $0xc] sm:$0xf] %v665
        %v667 = vld [vmem:[%s269] sm:$0xf]
        %v668 = vld [vmem:[#allocation5 + $0x34] sm:$0xf]
        %v669 = vld [vmem:[#allocation8 + $0x4] sm:$0x1]
        %v671 = vlaneseq
        %v672 = vshrl.u32 %v671, 7
        %v673 = vsub.s32 0, %v672
        %v674 = vrot.slane %v669, %v673
        %v677 = vunpack.c.l.b16 %v667
        %v678 = vpack.c.b16 %v677, %v677
        %679 = vrot.lane.b32.xlu0 %v678, 24
        %v680 = vpop.permute.xlu0 %679
        %v682 = vsel %vm605, %v680, 0
        %v685 = vsel %vm337, %v668, 0
        %687 = vmatprep.subr.bf16.mxu0 0
        %688 = vmatpush1.bf16.msra.mxu0 0
        %689 = vmatprep.subr.bf16.mxu0 0
        %690 = vmatpush1.bf16.msra.mxu0 0
        %691 = vmatprep.subr.bf16.mxu0 0
        %692 = vmatpush1.bf16.msra.mxu0 0
        %693 = vmatprep.subr.bf16.mxu0 0
        %694 = vmatpush1.bf16.msra.mxu0 0
        %695 = vmatprep.subr.bf16.mxu0 0
        %696 = vmatpush1.bf16.msra.mxu0 0
        %697 = vmatprep.subr.bf16.mxu0 0
        %698 = vmatpush1.bf16.msra.mxu0 0
        %699 = vmatprep.subr.bf16.mxu0 0
        %700 = vmatpush1.bf16.msra.mxu0 0
        %701 = vmatprep.subr.bf16.mxu0 0
        %702 = vmatpush1.bf16.msra.mxu0 %v685
        %703 = vmatprep.subr.bf16.mxu0 0
        %704 = vmatpush2.bf16.msra.mxu0 0
        %705 = vmatprep.subr.bf16.mxu0 0
        %706 = vmatpush2.bf16.msra.mxu0 0
        %707 = vmatprep.subr.bf16.mxu0 0
        %708 = vmatpush2.bf16.msra.mxu0 0
        %709 = vmatprep.subr.bf16.mxu0 0
        %710 = vmatpush2.bf16.msra.mxu0 0
        %711 = vmatprep.subr.bf16.mxu0 0
        %712 = vmatpush2.bf16.msra.mxu0 0
        %713 = vmatprep.subr.bf16.mxu0 0
        %714 = vmatpush2.bf16.msra.mxu0 0
        %715 = vmatprep.subr.bf16.mxu0 0
        %716 = vmatpush2.bf16.msra.mxu0 0
        %717 = vmatprep.subr.bf16.mxu0 0
        %718 = vmatpush2.bf16.msra.mxu0 0
        %719 = vmatprep.mubr.bf16.mxu0 0
        %720 = vmatmul.mubr.bf16.gmra.mxu0 %v682
        %v721 = vpop.f32.mrf.mxu0
        %v722 = vadd.f32 %v674, %v721
        %v723 = vpop.f32.mrf.mxu0
        %v724 = vpop.f32.mrf.mxu0
        %v725 = vpop.f32.mrf.mxu0
        %726 = vdwg.mxu0
        %727 = vadd.xlane.f32.xlu0 %v722
        %v728 = vpop.xlane.xlu0 %727
        %v729 = vmul.f32 %v728, 0.0078125
        %v730 = vsub.f32 %v722, %v729
        %v731 = vmul.f32 %v730, %v730
        %732 = vadd.xlane.f32.xlu0 %v731
        %v733 = vpop.xlane.xlu0 %732
        %v734 = vmul.f32 %v733, 0.0078125
        %v735 = vadd.f32 %v734, 1e-05
        %v736 = vrsqrt.pop %v735
        %v737 = vmul.f32 %v730, %v736
        %v738 = vmul.f32 %v737, %v396
        %v739 = vadd.f32 %v738, %v403
        %v740 = vpack.c.bf16 %v739, %v739
        %741 = vst [vmem:[%s309 + $0x10] sm:$0xf] %v740
        %v742 = vld [vmem:[%s269] sm:$0xf]
        %v743 = vld [vmem:[#allocation5 + $0x38] sm:$0xf]
        %v744 = vld [vmem:[#allocation8 + $0x5] sm:$0x1]
        %v746 = vlaneseq
        %v747 = vshrl.u32 %v746, 7
        %v748 = vsub.s32 0, %v747
        %v749 = vrot.slane %v744, %v748
        %v752 = vunpack.c.l.b16 %v742
        %v753 = vpack.c.b16 %v752, %v752
        %754 = vrot.lane.b32.xlu0 %v753, 16
        %v755 = vpop.permute.xlu0 %754
        %v757 = vsel %vm605, %v755, 0
        %v760 = vsel %vm337, %v743, 0
        %762 = vmatprep.subr.bf16.mxu0 0
        %763 = vmatpush1.bf16.msra.mxu0 0
        %764 = vmatprep.subr.bf16.mxu0 0
        %765 = vmatpush1.bf16.msra.mxu0 0
        %766 = vmatprep.subr.bf16.mxu0 0
        %767 = vmatpush1.bf16.msra.mxu0 0
        %768 = vmatprep.subr.bf16.mxu0 0
        %769 = vmatpush1.bf16.msra.mxu0 0
        %770 = vmatprep.subr.bf16.mxu0 0
        %771 = vmatpush1.bf16.msra.mxu0 0
        %772 = vmatprep.subr.bf16.mxu0 0
        %773 = vmatpush1.bf16.msra.mxu0 0
        %774 = vmatprep.subr.bf16.mxu0 0
        %775 = vmatpush1.bf16.msra.mxu0 0
        %776 = vmatprep.subr.bf16.mxu0 0
        %777 = vmatpush1.bf16.msra.mxu0 %v760
        %778 = vmatprep.subr.bf16.mxu0 0
        %779 = vmatpush2.bf16.msra.mxu0 0
        %780 = vmatprep.subr.bf16.mxu0 0
        %781 = vmatpush2.bf16.msra.mxu0 0
        %782 = vmatprep.subr.bf16.mxu0 0
        %783 = vmatpush2.bf16.msra.mxu0 0
        %784 = vmatprep.subr.bf16.mxu0 0
        %785 = vmatpush2.bf16.msra.mxu0 0
        %786 = vmatprep.subr.bf16.mxu0 0
        %787 = vmatpush2.bf16.msra.mxu0 0
        %788 = vmatprep.subr.bf16.mxu0 0
        %789 = vmatpush2.bf16.msra.mxu0 0
        %790 = vmatprep.subr.bf16.mxu0 0
        %791 = vmatpush2.bf16.msra.mxu0 0
        %792 = vmatprep.subr.bf16.mxu0 0
        %793 = vmatpush2.bf16.msra.mxu0 0
        %794 = vmatprep.mubr.bf16.mxu0 0
        %795 = vmatmul.mubr.bf16.gmra.mxu0 %v757
        %v796 = vpop.f32.mrf.mxu0
        %v797 = vadd.f32 %v749, %v796
        %v798 = vpop.f32.mrf.mxu0
        %v799 = vpop.f32.mrf.mxu0
        %v800 = vpop.f32.mrf.mxu0
        %801 = vdwg.mxu0
        %802 = vadd.xlane.f32.xlu0 %v797
        %v803 = vpop.xlane.xlu0 %802
        %v804 = vmul.f32 %v803, 0.0078125
        %v805 = vsub.f32 %v797, %v804
        %v806 = vmul.f32 %v805, %v805
        %807 = vadd.xlane.f32.xlu0 %v806
        %v808 = vpop.xlane.xlu0 %807
        %v809 = vmul.f32 %v808, 0.0078125
        %v810 = vadd.f32 %v809, 1e-05
        %v811 = vrsqrt.pop %v810
        %v812 = vmul.f32 %v805, %v811
        %v813 = vmul.f32 %v812, %v396
        %v814 = vadd.f32 %v813, %v403
        %v815 = vpack.c.bf16 %v814, %v814
        %816 = vst [vmem:[%s309 + $0x14] sm:$0xf] %v815
        %v817 = vld [vmem:[%s269] sm:$0xf]
        %v818 = vld [vmem:[#allocation5 + $0x3c] sm:$0xf]
        %v819 = vld [vmem:[#allocation8 + $0x6] sm:$0x1]
        %v821 = vlaneseq
        %v822 = vshrl.u32 %v821, 7
        %v823 = vsub.s32 0, %v822
        %v824 = vrot.slane %v819, %v823
        %v827 = vunpack.c.l.b16 %v817
        %v828 = vpack.c.b16 %v827, %v827
        %829 = vrot.lane.b32.xlu0 %v828, 8
        %v830 = vpop.permute.xlu0 %829
        %v832 = vsel %vm605, %v830, 0
        %v835 = vsel %vm337, %v818, 0
        %837 = vmatprep.subr.bf16.mxu0 0
        %838 = vmatpush1.bf16.msra.mxu0 0
        %839 = vmatprep.subr.bf16.mxu0 0
        %840 = vmatpush1.bf16.msra.mxu0 0
        %841 = vmatprep.subr.bf16.mxu0 0
        %842 = vmatpush1.bf16.msra.mxu0 0
        %843 = vmatprep.subr.bf16.mxu0 0
        %844 = vmatpush1.bf16.msra.mxu0 0
        %845 = vmatprep.subr.bf16.mxu0 0
        %846 = vmatpush1.bf16.msra.mxu0 0
        %847 = vmatprep.subr.bf16.mxu0 0
        %848 = vmatpush1.bf16.msra.mxu0 0
        %849 = vmatprep.subr.bf16.mxu0 0
        %850 = vmatpush1.bf16.msra.mxu0 0
        %851 = vmatprep.subr.bf16.mxu0 0
        %852 = vmatpush1.bf16.msra.mxu0 %v835
        %853 = vmatprep.subr.bf16.mxu0 0
        %854 = vmatpush2.bf16.msra.mxu0 0
        %855 = vmatprep.subr.bf16.mxu0 0
        %856 = vmatpush2.bf16.msra.mxu0 0
        %857 = vmatprep.subr.bf16.mxu0 0
        %858 = vmatpush2.bf16.msra.mxu0 0
        %859 = vmatprep.subr.bf16.mxu0 0
        %860 = vmatpush2.bf16.msra.mxu0 0
        %861 = vmatprep.subr.bf16.mxu0 0
        %862 = vmatpush2.bf16.msra.mxu0 0
        %863 = vmatprep.subr.bf16.mxu0 0
        %864 = vmatpush2.bf16.msra.mxu0 0
        %865 = vmatprep.subr.bf16.mxu0 0
        %866 = vmatpush2.bf16.msra.mxu0 0
        %867 = vmatprep.subr.bf16.mxu0 0
        %868 = vmatpush2.bf16.msra.mxu0 0
        %869 = vmatprep.mubr.bf16.mxu0 0
        %870 = vmatmul.mubr.bf16.gmra.mxu0 %v832
        %v871 = vpop.f32.mrf.mxu0
        %v872 = vadd.f32 %v824, %v871
        %v873 = vpop.f32.mrf.mxu0
        %v874 = vpop.f32.mrf.mxu0
        %v875 = vpop.f32.mrf.mxu0
        %876 = vdwg.mxu0
        %877 = vadd.xlane.f32.xlu0 %v872
        %v878 = vpop.xlane.xlu0 %877
        %v879 = vmul.f32 %v878, 0.0078125
        %v880 = vsub.f32 %v872, %v879
        %v881 = vmul.f32 %v880, %v880
        %882 = vadd.xlane.f32.xlu0 %v881
        %v883 = vpop.xlane.xlu0 %882
        %v884 = vmul.f32 %v883, 0.0078125
        %v885 = vadd.f32 %v884, 1e-05
        %v886 = vrsqrt.pop %v885
        %v887 = vmul.f32 %v880, %v886
        %v888 = vmul.f32 %v887, %v396
        %v889 = vadd.f32 %v888, %v403
        %v890 = vpack.c.bf16 %v889, %v889
        %891 = vst [vmem:[%s309 + $0x18] sm:$0xf] %v890
        %v892 = vld [vmem:[%s269 + $0x4] sm:$0xf]
        %v893 = vld [vmem:[#allocation7] sm:$0xff]
        %v894 = vld [vmem:[#allocation7 + $0x8] sm:$0xff]
        %v895 = vld [vmem:[#allocation7 + $0x10] sm:$0xff]
        %v896 = vld [vmem:[#allocation7 + $0x18] sm:$0xff]
        %v897 = vld [vmem:[#allocation7 + $0x20] sm:$0xff]
        %v898 = vld [vmem:[#allocation7 + $0x28] sm:$0xff]
        %v899 = vld [vmem:[#allocation7 + $0x30] sm:$0xff]
        %v900 = vld [vmem:[#allocation7 + $0x38] sm:$0xff]
        %v901 = vld [vmem:[#allocation7 + $0x40] sm:$0xff]
        %v902 = vld [vmem:[#allocation7 + $0x48] sm:$0xff]
        %v903 = vld [vmem:[#allocation7 + $0x50] sm:$0xff]
        %v904 = vld [vmem:[#allocation7 + $0x58] sm:$0xff]
        %v905 = vld [vmem:[#allocation7 + $0x60] sm:$0xff]
        %v906 = vld [vmem:[#allocation7 + $0x68] sm:$0xff]
        %v907 = vld [vmem:[#allocation7 + $0x70] sm:$0xff]
        %v908 = vld [vmem:[#allocation7 + $0x78] sm:$0xff]
        %v909 = vld [vmem:[#allocation8 + $0x7] sm:$0xff]
        %v911 = vlaneseq
        %v912 = vshrl.u32 %v911, 7
        %v913 = vsub.s32 0, %v912
        %v914 = vrot.slane %v909, %v913
        %v915 = vlaneseq
        %v916 = vshrl.u32 %v915, 7
        %v917 = vsub.s32 1, %v916
        %v918 = vrot.slane %v909, %v917
        %v919 = vlaneseq
        %v920 = vshrl.u32 %v919, 7
        %v921 = vsub.s32 2, %v920
        %v922 = vrot.slane %v909, %v921
        %v923 = vlaneseq
        %v924 = vshrl.u32 %v923, 7
        %v925 = vsub.s32 3, %v924
        %v926 = vrot.slane %v909, %v925
        %v927 = vlaneseq
        %v928 = vshrl.u32 %v927, 7
        %v929 = vsub.s32 4, %v928
        %v930 = vrot.slane %v909, %v929
        %v931 = vlaneseq
        %v932 = vshrl.u32 %v931, 7
        %v933 = vsub.s32 5, %v932
        %v934 = vrot.slane %v909, %v933
        %v935 = vlaneseq
        %v936 = vshrl.u32 %v935, 7
        %v937 = vsub.s32 6, %v936
        %v938 = vrot.slane %v909, %v937
        %v939 = vlaneseq
        %v940 = vshrl.u32 %v939, 7
        %v941 = vsub.s32 7, %v940
        %v942 = vrot.slane %v909, %v941
        %v967 = vunpack.c.l.b16 %v893
        %v968 = vunpack.c.h.b16 %v893
        %v969 = vunpack.c.l.b16 %v894
        %v970 = vunpack.c.h.b16 %v894
        %v971 = vunpack.c.l.b16 %v895
        %v972 = vunpack.c.h.b16 %v895
        %v973 = vunpack.c.l.b16 %v896
        %v974 = vunpack.c.h.b16 %v896
        %v975 = vunpack.c.l.b16 %v897
        %v976 = vunpack.c.h.b16 %v897
        %v977 = vunpack.c.l.b16 %v898
        %v978 = vunpack.c.h.b16 %v898
        %v979 = vunpack.c.l.b16 %v899
        %v980 = vunpack.c.h.b16 %v899
        %v981 = vunpack.c.l.b16 %v900
        %v982 = vunpack.c.h.b16 %v900
        %v983 = vunpack.c.l.b16 %v901
        %v984 = vunpack.c.h.b16 %v901
        %v985 = vunpack.c.l.b16 %v902
        %v986 = vunpack.c.h.b16 %v902
        %v987 = vunpack.c.l.b16 %v903
        %v988 = vunpack.c.h.b16 %v903
        %v989 = vunpack.c.l.b16 %v904
        %v990 = vunpack.c.h.b16 %v904
        %v991 = vunpack.c.l.b16 %v905
        %v992 = vunpack.c.h.b16 %v905
        %v993 = vunpack.c.l.b16 %v906
        %v994 = vunpack.c.h.b16 %v906
        %v995 = vunpack.c.l.b16 %v907
        %v996 = vunpack.c.h.b16 %v907
        %v997 = vunpack.c.l.b16 %v908
        %v998 = vunpack.c.h.b16 %v908
        %v999 = vpack.c.b16 %v975, %v967
        %v1000 = vpack.c.b16 %v976, %v968
        %v1001 = vpack.c.b16 %v977, %v969
        %v1002 = vpack.c.b16 %v978, %v970
        %v1003 = vpack.c.b16 %v979, %v971
        %v1004 = vpack.c.b16 %v980, %v972
        %v1005 = vpack.c.b16 %v981, %v973
        %v1006 = vpack.c.b16 %v982, %v974
        %v1007 = vpack.c.b16 %v991, %v983
        %v1008 = vpack.c.b16 %v992, %v984
        %v1009 = vpack.c.b16 %v993, %v985
        %v1010 = vpack.c.b16 %v994, %v986
        %v1011 = vpack.c.b16 %v995, %v987
        %v1012 = vpack.c.b16 %v996, %v988
        %v1013 = vpack.c.b16 %v997, %v989
        %v1014 = vpack.c.b16 %v998, %v990
        %v1032 = vsel %vm532, %v892, 0
        %1034 = vmatprep.subr.bf16.mxu0 0
        %1035 = vmatpush1.bf16.msra.mxu0 0
        %1036 = vmatprep.subr.bf16.mxu0 0
        %1037 = vmatpush1.bf16.msra.mxu0 0
        %1038 = vmatprep.subr.bf16.mxu0 0
        %1039 = vmatpush1.bf16.msra.mxu0 0
        %1040 = vmatprep.subr.bf16.mxu0 0
        %1041 = vmatpush1.bf16.msra.mxu0 0
        %1042 = vmatprep.subr.bf16.mxu0 0
        %1043 = vmatpush1.bf16.msra.mxu0 0
        %1044 = vmatprep.subr.bf16.mxu0 0
        %1045 = vmatpush1.bf16.msra.mxu0 0
        %1046 = vmatprep.subr.bf16.mxu0 %v1008
        %1047 = vmatpush1.bf16.msra.mxu0 %v1007
        %1048 = vmatprep.subr.bf16.mxu0 %v1000
        %1049 = vmatpush1.bf16.msra.mxu0 %v999
        %1050 = vmatprep.subr.bf16.mxu0 0
        %1051 = vmatpush2.bf16.msra.mxu0 0
        %1052 = vmatprep.subr.bf16.mxu0 0
        %1053 = vmatpush2.bf16.msra.mxu0 0
        %1054 = vmatprep.subr.bf16.mxu0 0
        %1055 = vmatpush2.bf16.msra.mxu0 0
        %1056 = vmatprep.subr.bf16.mxu0 0
        %1057 = vmatpush2.bf16.msra.mxu0 0
        %1058 = vmatprep.subr.bf16.mxu0 0
        %1059 = vmatpush2.bf16.msra.mxu0 0
        %1060 = vmatprep.subr.bf16.mxu0 0
        %1061 = vmatpush2.bf16.msra.mxu0 0
        %1062 = vmatprep.subr.bf16.mxu0 0
        %1063 = vmatpush2.bf16.msra.mxu0 0
        %1064 = vmatprep.subr.bf16.mxu0 0
        %1065 = vmatpush2.bf16.msra.mxu0 0
        %1066 = vmatprep.mubr.bf16.mxu0 0
        %1067 = vmatmul.mubr.bf16.gmra.mxu0 %v1032
        %v1068 = vpop.f32.mrf.mxu0
        %v1069 = vadd.f32 %v914, %v1068
        %v1070 = vpop.f32.mrf.mxu0
        %v1071 = vadd.f32 %v918, %v1070
        %v1072 = vpop.f32.mrf.mxu0
        %v1073 = vpop.f32.mrf.mxu0
        %1074 = vdwg.mxu0
        %1075 = vmatprep.subr.bf16.mxu0 0
        %1076 = vmatpush1.bf16.msra.mxu0 0
        %1077 = vmatprep.subr.bf16.mxu0 0
        %1078 = vmatpush1.bf16.msra.mxu0 0
        %1079 = vmatprep.subr.bf16.mxu0 0
        %1080 = vmatpush1.bf16.msra.mxu0 0
        %1081 = vmatprep.subr.bf16.mxu0 0
        %1082 = vmatpush1.bf16.msra.mxu0 0
        %1083 = vmatprep.subr.bf16.mxu0 0
        %1084 = vmatpush1.bf16.msra.mxu0 0
        %1085 = vmatprep.subr.bf16.mxu0 0
        %1086 = vmatpush1.bf16.msra.mxu0 0
        %1087 = vmatprep.subr.bf16.mxu0 %v1010
        %1088 = vmatpush1.bf16.msra.mxu0 %v1009
        %1089 = vmatprep.subr.bf16.mxu0 %v1002
        %1090 = vmatpush1.bf16.msra.mxu0 %v1001
        %1091 = vmatprep.subr.bf16.mxu0 0
        %1092 = vmatpush2.bf16.msra.mxu0 0
        %1093 = vmatprep.subr.bf16.mxu0 0
        %1094 = vmatpush2.bf16.msra.mxu0 0
        %1095 = vmatprep.subr.bf16.mxu0 0
        %1096 = vmatpush2.bf16.msra.mxu0 0
        %1097 = vmatprep.subr.bf16.mxu0 0
        %1098 = vmatpush2.bf16.msra.mxu0 0
        %1099 = vmatprep.subr.bf16.mxu0 0
        %1100 = vmatpush2.bf16.msra.mxu0 0
        %1101 = vmatprep.subr.bf16.mxu0 0
        %1102 = vmatpush2.bf16.msra.mxu0 0
        %1103 = vmatprep.subr.bf16.mxu0 0
        %1104 = vmatpush2.bf16.msra.mxu0 0
        %1105 = vmatprep.subr.bf16.mxu0 0
        %1106 = vmatpush2.bf16.msra.mxu0 0
        %1107 = vmatprep.mubr.bf16.mxu0 0
        %1108 = vmatmul.mubr.bf16.gmra.mxu0 %v1032
        %v1109 = vpop.f32.mrf.mxu0
        %v1110 = vadd.f32 %v922, %v1109
        %v1111 = vpop.f32.mrf.mxu0
        %v1112 = vadd.f32 %v926, %v1111
        %v1113 = vpop.f32.mrf.mxu0
        %v1114 = vpop.f32.mrf.mxu0
        %1115 = vdwg.mxu0
        %1116 = vmatprep.subr.bf16.mxu0 0
        %1117 = vmatpush1.bf16.msra.mxu0 0
        %1118 = vmatprep.subr.bf16.mxu0 0
        %1119 = vmatpush1.bf16.msra.mxu0 0
        %1120 = vmatprep.subr.bf16.mxu0 0
        %1121 = vmatpush1.bf16.msra.mxu0 0
        %1122 = vmatprep.subr.bf16.mxu0 0
        %1123 = vmatpush1.bf16.msra.mxu0 0
        %1124 = vmatprep.subr.bf16.mxu0 0
        %1125 = vmatpush1.bf16.msra.mxu0 0
        %1126 = vmatprep.subr.bf16.mxu0 0
        %1127 = vmatpush1.bf16.msra.mxu0 0
        %1128 = vmatprep.subr.bf16.mxu0 %v1012
        %1129 = vmatpush1.bf16.msra.mxu0 %v1011
        %1130 = vmatprep.subr.bf16.mxu0 %v1004
        %1131 = vmatpush1.bf16.msra.mxu0 %v1003
        %1132 = vmatprep.subr.bf16.mxu0 0
        %1133 = vmatpush2.bf16.msra.mxu0 0
        %1134 = vmatprep.subr.bf16.mxu0 0
        %1135 = vmatpush2.bf16.msra.mxu0 0
        %1136 = vmatprep.subr.bf16.mxu0 0
        %1137 = vmatpush2.bf16.msra.mxu0 0
        %1138 = vmatprep.subr.bf16.mxu0 0
        %1139 = vmatpush2.bf16.msra.mxu0 0
        %1140 = vmatprep.subr.bf16.mxu0 0
        %1141 = vmatpush2.bf16.msra.mxu0 0
        %1142 = vmatprep.subr.bf16.mxu0 0
        %1143 = vmatpush2.bf16.msra.mxu0 0
        %1144 = vmatprep.subr.bf16.mxu0 0
        %1145 = vmatpush2.bf16.msra.mxu0 0
        %1146 = vmatprep.subr.bf16.mxu0 0
        %1147 = vmatpush2.bf16.msra.mxu0 0
        %1148 = vmatprep.mubr.bf16.mxu0 0
        %1149 = vmatmul.mubr.bf16.gmra.mxu0 %v1032
        %v1150 = vpop.f32.mrf.mxu0
        %v1151 = vadd.f32 %v930, %v1150
        %v1152 = vpop.f32.mrf.mxu0
        %v1153 = vadd.f32 %v934, %v1152
        %v1154 = vpop.f32.mrf.mxu0
        %v1155 = vpop.f32.mrf.mxu0
        %1156 = vdwg.mxu0
        %1157 = vmatprep.subr.bf16.mxu0 0
        %1158 = vmatpush1.bf16.msra.mxu0 0
        %1159 = vmatprep.subr.bf16.mxu0 0
        %1160 = vmatpush1.bf16.msra.mxu0 0
        %1161 = vmatprep.subr.bf16.mxu0 0
        %1162 = vmatpush1.bf16.msra.mxu0 0
        %1163 = vmatprep.subr.bf16.mxu0 0
        %1164 = vmatpush1.bf16.msra.mxu0 0
        %1165 = vmatprep.subr.bf16.mxu0 0
        %1166 = vmatpush1.bf16.msra.mxu0 0
        %1167 = vmatprep.subr.bf16.mxu0 0
        %1168 = vmatpush1.bf16.msra.mxu0 0
        %1169 = vmatprep.subr.bf16.mxu0 %v1014
        %1170 = vmatpush1.bf16.msra.mxu0 %v1013
        %1171 = vmatprep.subr.bf16.mxu0 %v1006
        %1172 = vmatpush1.bf16.msra.mxu0 %v1005
        %1173 = vmatprep.subr.bf16.mxu0 0
        %1174 = vmatpush2.bf16.msra.mxu0 0
        %1175 = vmatprep.subr.bf16.mxu0 0
        %1176 = vmatpush2.bf16.msra.mxu0 0
        %1177 = vmatprep.subr.bf16.mxu0 0
        %1178 = vmatpush2.bf16.msra.mxu0 0
        %1179 = vmatprep.subr.bf16.mxu0 0
        %1180 = vmatpush2.bf16.msra.mxu0 0
        %1181 = vmatprep.subr.bf16.mxu0 0
        %1182 = vmatpush2.bf16.msra.mxu0 0
        %1183 = vmatprep.subr.bf16.mxu0 0
        %1184 = vmatpush2.bf16.msra.mxu0 0
        %1185 = vmatprep.subr.bf16.mxu0 0
        %1186 = vmatpush2.bf16.msra.mxu0 0
        %1187 = vmatprep.subr.bf16.mxu0 0
        %1188 = vmatpush2.bf16.msra.mxu0 0
        %1189 = vmatprep.mubr.bf16.mxu0 0
        %1190 = vmatmul.mubr.bf16.gmra.mxu0 %v1032
        %v1191 = vpop.f32.mrf.mxu0
        %v1192 = vadd.f32 %v938, %v1191
        %v1193 = vpop.f32.mrf.mxu0
        %v1194 = vadd.f32 %v942, %v1193
        %v1195 = vpop.f32.mrf.mxu0
        %v1196 = vpop.f32.mrf.mxu0
        %1197 = vdwg.mxu0
        %1198 = vadd.xlane.f32.xlu0 %v1069
        %v1199 = vpop.xlane.xlu0 %1198
        %v1200 = vmul.f32 %v1199, 0.0078125
        %v1201 = vsub.f32 %v1069, %v1200
        %v1202 = vmul.f32 %v1201, %v1201
        %1203 = vadd.xlane.f32.xlu0 %v1202
        %v1204 = vpop.xlane.xlu0 %1203
        %v1205 = vmul.f32 %v1204, 0.0078125
        %v1206 = vadd.f32 %v1205, 1e-05
        %v1207 = vrsqrt.pop %v1206
        %v1208 = vmul.f32 %v1201, %v1207
        %v1209 = vmul.f32 %v1208, %v396
        %v1210 = vadd.f32 %v1209, %v403
        %v1211 = vpack.c.bf16 %v1210, %v1210
        %1212 = vst [vmem:[%s309 + $0x1c] sm:$0xf] %v1211
        %1213 = vadd.xlane.f32.xlu0 %v1071
        %v1214 = vpop.xlane.xlu0 %1213
        %v1215 = vmul.f32 %v1214, 0.0078125
        %v1216 = vsub.f32 %v1071, %v1215
        %v1217 = vmul.f32 %v1216, %v1216
        %1218 = vadd.xlane.f32.xlu0 %v1217
        %v1219 = vpop.xlane.xlu0 %1218
        %v1220 = vmul.f32 %v1219, 0.0078125
        %v1221 = vadd.f32 %v1220, 1e-05
        %v1222 = vrsqrt.pop %v1221
        %v1223 = vmul.f32 %v1216, %v1222
        %v1224 = vmul.f32 %v1223, %v396
        %v1225 = vadd.f32 %v1224, %v403
        %v1226 = vpack.c.bf16 %v1225, %v1225
        %1227 = vst [vmem:[%s309 + $0x20] sm:$0xf] %v1226
        %1228 = vadd.xlane.f32.xlu0 %v1110
        %v1229 = vpop.xlane.xlu0 %1228
        %v1230 = vmul.f32 %v1229, 0.0078125
        %v1231 = vsub.f32 %v1110, %v1230
        %v1232 = vmul.f32 %v1231, %v1231
        %1233 = vadd.xlane.f32.xlu0 %v1232
        %v1234 = vpop.xlane.xlu0 %1233
        %v1235 = vmul.f32 %v1234, 0.0078125
        %v1236 = vadd.f32 %v1235, 1e-05
        %v1237 = vrsqrt.pop %v1236
        %v1238 = vmul.f32 %v1231, %v1237
        %v1239 = vmul.f32 %v1238, %v396
        %v1240 = vadd.f32 %v1239, %v403
        %v1241 = vpack.c.bf16 %v1240, %v1240
        %1242 = vst [vmem:[%s309 + $0x24] sm:$0xf] %v1241
        %1243 = vadd.xlane.f32.xlu0 %v1112
        %v1244 = vpop.xlane.xlu0 %1243
        %v1245 = vmul.f32 %v1244, 0.0078125
        %v1246 = vsub.f32 %v1112, %v1245
        %v1247 = vmul.f32 %v1246, %v1246
        %1248 = vadd.xlane.f32.xlu0 %v1247
        %v1249 = vpop.xlane.xlu0 %1248
        %v1250 = vmul.f32 %v1249, 0.0078125
        %v1251 = vadd.f32 %v1250, 1e-05
        %v1252 = vrsqrt.pop %v1251
        %v1253 = vmul.f32 %v1246, %v1252
        %v1254 = vmul.f32 %v1253, %v396
        %v1255 = vadd.f32 %v1254, %v403
        %v1256 = vpack.c.bf16 %v1255, %v1255
        %1257 = vst [vmem:[%s309 + $0x28] sm:$0xf] %v1256
        %1258 = vadd.xlane.f32.xlu0 %v1151
        %v1259 = vpop.xlane.xlu0 %1258
        %v1260 = vmul.f32 %v1259, 0.0078125
        %v1261 = vsub.f32 %v1151, %v1260
        %v1262 = vmul.f32 %v1261, %v1261
        %1263 = vadd.xlane.f32.xlu0 %v1262
        %v1264 = vpop.xlane.xlu0 %1263
        %v1265 = vmul.f32 %v1264, 0.0078125
        %v1266 = vadd.f32 %v1265, 1e-05
        %v1267 = vrsqrt.pop %v1266
        %v1268 = vmul.f32 %v1261, %v1267
        %v1269 = vmul.f32 %v1268, %v396
        %v1270 = vadd.f32 %v1269, %v403
        %v1271 = vpack.c.bf16 %v1270, %v1270
        %1272 = vst [vmem:[%s309 + $0x2c] sm:$0xf] %v1271
        %1273 = vadd.xlane.f32.xlu0 %v1153
        %v1274 = vpop.xlane.xlu0 %1273
        %v1275 = vmul.f32 %v1274, 0.0078125
        %v1276 = vsub.f32 %v1153, %v1275
        %v1277 = vmul.f32 %v1276, %v1276
        %1278 = vadd.xlane.f32.xlu0 %v1277
        %v1279 = vpop.xlane.xlu0 %1278
        %v1280 = vmul.f32 %v1279, 0.0078125
        %v1281 = vadd.f32 %v1280, 1e-05
        %v1282 = vrsqrt.pop %v1281
        %v1283 = vmul.f32 %v1276, %v1282
        %v1284 = vmul.f32 %v1283, %v396
        %v1285 = vadd.f32 %v1284, %v403
        %v1286 = vpack.c.bf16 %v1285, %v1285
        %1287 = vst [vmem:[%s309 + $0x30] sm:$0xf] %v1286
        %1288 = vadd.xlane.f32.xlu0 %v1192
        %v1289 = vpop.xlane.xlu0 %1288
        %v1290 = vmul.f32 %v1289, 0.0078125
        %v1291 = vsub.f32 %v1192, %v1290
        %v1292 = vmul.f32 %v1291, %v1291
        %1293 = vadd.xlane.f32.xlu0 %v1292
        %v1294 = vpop.xlane.xlu0 %1293
        %v1295 = vmul.f32 %v1294, 0.0078125
        %v1296 = vadd.f32 %v1295, 1e-05
        %v1297 = vrsqrt.pop %v1296
        %v1298 = vmul.f32 %v1291, %v1297
        %v1299 = vmul.f32 %v1298, %v396
        %v1300 = vadd.f32 %v1299, %v403
        %v1301 = vpack.c.bf16 %v1300, %v1300
        %1302 = vst [vmem:[%s309 + $0x34] sm:$0xf] %v1301
        %1303 = vadd.xlane.f32.xlu0 %v1194
        %v1304 = vpop.xlane.xlu0 %1303
        %v1305 = vmul.f32 %v1304, 0.0078125
        %v1306 = vsub.f32 %v1194, %v1305
        %v1307 = vmul.f32 %v1306, %v1306
        %1308 = vadd.xlane.f32.xlu0 %v1307
        %v1309 = vpop.xlane.xlu0 %1308
        %v1310 = vmul.f32 %v1309, 0.0078125
        %v1311 = vadd.f32 %v1310, 1e-05
        %v1312 = vrsqrt.pop %v1311
        %v1313 = vmul.f32 %v1306, %v1312
        %v1314 = vmul.f32 %v1313, %v396
        %v1315 = vadd.f32 %v1314, %v403
        %v1316 = vpack.c.bf16 %v1315, %v1315
        %1317 = vst [vmem:[%s309 + $0x38] sm:$0xf] %v1316
        %s1318 = sand.u32 %s164, 1
        %s1319 = scalar_lea.sflag [#allocation4], %s1318
        %s1320 = sand.u32 %s164, 1
        %s1321 = smul.addr %s1320, 60
        %s1322 = scalar_lea.vmem [#allocation10], %s1321
        // Predicated region
        $region61: #{tpu_custom_call.1} parent=43 // pred_check
          %p1323 = pneg %p174
        $region62: #{tpu_custom_call.1} parent=43 // pred_check_branch
          %1325 = sbr.rel (%p1323) target = $region64
        $region63: #{tpu_custom_call.1} parent=43 // pred_region
          %s1327 = ssub.s32 960, 960
          %1328 = vsyncadd %s1319, %s1327
          %s1329 = smul.addr %s25, 15
          %s1330 = smul.addr %s1329, 64
          %s1331 = scalar_lea.hbm %s6, %s1330
          %s1333 = sshll.u32 %s1322, 4
          %s1334 = int_to_ptr.vmem [resolvable:$true] %s1333
          %1336 = dma.vmem_to_hbm [thread:$0]  %s1334, 960, %s1331, %s1319
        $region64: #{tpu_custom_call.1} parent=43 // pred_fallthru
          _
      $region44: #{tpu_custom_call.1} parent=5 // pred_fallthru
        _
      %p1337 = scmp.le.s32.totalorder 2, %s20
      // Predicated region
      $region65: #{tpu_custom_call.1} parent=5 // pred_check
        %p1338 = pneg %p1337
      $region66: #{tpu_custom_call.1} parent=5 // pred_check_branch
        %1340 = sbr.rel (%p1338) target = $region68
      $region67: #{tpu_custom_call.1} parent=5 // pred_region
        %s1341 = ssub.s32 %s20, 2
        // Predicated region
        $region69: #{tpu_custom_call.1} parent=67 // pred_check
          %p1342 = pneg %p180
        $region70: #{tpu_custom_call.1} parent=67 // pred_check_branch
          %1344 = sbr.rel (%p1342) target = $region72
        $region71: #{tpu_custom_call.1} parent=67 // pred_region
          %s1345 = sand.u32 %s165, 1
          %s1346 = scalar_lea.sflag [#allocation4], %s1345
          %s1347 = sand.u32 %s165, 1
          %s1348 = smul.addr %s1347, 60
          %s1349 = scalar_lea.vmem [#allocation10], %s1348
          %1350 = dma.done %s1346, 960
        $region72: #{tpu_custom_call.1} parent=67 // pred_fallthru
          _
      $region68: #{tpu_custom_call.1} parent=5 // pred_fallthru
        _
    $region6: #{tpu_custom_call.1} parent=1 // loop_footer
      %s24 = sadd.s32 1, %s20
    $region7: #{tpu_custom_call.1} parent=1 // loop_footer_branch
      %19 = sbr.rel target = $region3
    $region8: #{tpu_custom_call.1} parent=1 // loop_exit
      _
    %1351 = vsyncpa [#allocation3], 1
    %s1352 = scalar_lea.sflag [#allocation3], 1
    %1353 = vsyncpa %s1352, 1
    %1354 = vsyncpa [#allocation6], 1
    %1355 = vsyncpa [#allocation9], 1
    %1356 = vsyncpa [#allocation4], 1
    %s1357 = scalar_lea.sflag [#allocation4], 1
    %1358 = vsyncpa %s1357, 1

</llo_original>
